<compile_context>
chip_gen: v5e
topology: v5e:2x2
jax: 0.10.0
libtpu: 0.0.40
codegen_flags: <defaults>
</compile_context>

<pallas_src>
import functools
import math

import jax
import jax.numpy as jnp
from jax import lax
from jax.experimental import pallas as pl
from jax.experimental.pallas import tpu as pltpu


_INV_SQRT2 = 1.0 / math.sqrt(2.0)


def _gelu(x, approximate):
    if approximate:
        # tanh form: routes the transcendental to the EUP slot instead of a
        # long VPU erf polynomial (useful if the kernel goes VALU-bound).
        return jax.nn.gelu(x, approximate=True)
    # PyTorch nn.GELU default: 0.5 * x * (1 + erf(x / sqrt(2)))
    return 0.5 * x * (1.0 + lax.erf(x * _INV_SQRT2))


def _round_up(a, b):
    return ((a + b - 1) // b) * b


def _vmem_capacity_bytes():
    try:
        return int(pltpu.get_tpu_info().vmem_capacity_bytes)
    except Exception:
        return 64 << 20  # conservative default (v7x per-TC capacity)


def _mlp_kernel_resident(x_ref, w1_ref, b1_ref, w2_ref, b2_ref, o_ref, *,
                         mm_precision, approximate):
    x = x_ref[...].astype(w1_ref.dtype)
    h = jnp.dot(x, w1_ref[...], preferred_element_type=jnp.float32,
                precision=mm_precision)
    h = _gelu(h + b1_ref[...], approximate)
    o = jnp.dot(h.astype(w2_ref.dtype), w2_ref[...],
                preferred_element_type=jnp.float32, precision=mm_precision)
    o_ref[...] = (o + b2_ref[...]).astype(o_ref.dtype)


def _mlp_kernel_streamed(x_ref, w1_ref, b1_ref, w2_ref, b2_ref, o_ref, acc_ref,
                         *, mm_precision, approximate):
    k = pl.program_id(1)

    @pl.when(k == 0)
    def _():
        acc_ref[...] = jnp.zeros_like(acc_ref)

    x = x_ref[...].astype(w1_ref.dtype)
    h = jnp.dot(x, w1_ref[...], preferred_element_type=jnp.float32,
                precision=mm_precision)
    h = _gelu(h + b1_ref[...], approximate)
    acc_ref[...] += jnp.dot(h.astype(w2_ref.dtype), w2_ref[...],
                            preferred_element_type=jnp.float32,
                            precision=mm_precision)

    @pl.when(k == pl.num_programs(1) - 1)
    def _():
        o_ref[...] = (acc_ref[...] + b2_ref[...]).astype(o_ref.dtype)


def mlp_pallas(x, w1, b1, w2, b2, *, tm=256, compute_dtype=jnp.bfloat16,
               gelu_approximate=False, hidden_block=None):
    """x: (..., D). w1: (D, H), b1: (H,), w2: (H, O), b2: (O,).

    compute_dtype: bfloat16 by default (single-pass MXU, half the weight
    VMEM/HBM traffic; accumulation stays f32).  Pass jnp.float32 for strict
    parity with an f32 reference (uses Precision.HIGHEST).
    hidden_block: force the streamed-weights path with this hidden chunk.
    """
    orig_shape = x.shape
    D = orig_shape[-1]
    H = w1.shape[1]
    O = w2.shape[1]
    out_dtype = x.dtype
    compute_dtype = jnp.dtype(compute_dtype or jnp.bfloat16)

    # x keeps its original dtype (cast to compute dtype in-kernel -> no extra
    # HBM pass in the wrapper); weights are cast/padded once (small).
    x2 = x.reshape(-1, D)
    w1c = w1.astype(compute_dtype)
    w2c = w2.astype(compute_dtype)
    b1f = b1.astype(jnp.float32).reshape(1, H)
    b2f = b2.astype(jnp.float32)

    M = x2.shape[0]
    cbytes = compute_dtype.itemsize
    xbytes = jnp.dtype(x2.dtype).itemsize
    obytes = jnp.dtype(out_dtype).itemsize

    # ---- token tile: sublane-pack aligned; split a single big tile in two so
    # the "parallel" token axis can feed both v7x TensorCores.
    pack = 32 // min(xbytes, obytes)          # 8 (f32) / 16 (bf16) / 32 (int8)
    tm = min(tm, _round_up(max(M, 1), pack))
    tm = _round_up(tm, pack)
    if pl.cdiv(M, tm) == 1 and tm > 128:
        tm = max(128, _round_up(pl.cdiv(M, 2), pack))
    n_tiles = pl.cdiv(M, tm)

    # ---- lane-dense output: pad O to a multiple of 128 (weight-only pads).
    O_pad = _round_up(O, 128)
    if O_pad != O:
        w2c = jnp.pad(w2c, ((0, 0), (0, O_pad - O)))
        b2f = jnp.pad(b2f, (0, O_pad - O))
    b2f = b2f.reshape(1, O_pad)

    mm_precision = (lax.Precision.HIGHEST if compute_dtype == jnp.float32
                    else lax.Precision.DEFAULT)

    cap = _vmem_capacity_bytes()
    weight_bytes = (D * H + H * O_pad) * cbytes

    cost = pl.CostEstimate(
        flops=2 * M * (D * H + H * O_pad),
        transcendentals=M * H,
        bytes_accessed=(M * D * xbytes + weight_bytes + (H + O_pad) * 4
                        + M * O_pad * obytes),
    )

    stream = (hidden_block is not None) or (weight_bytes > int(0.40 * cap))

    if not stream:
        # -------- resident-weights path --------------------------------------
        est = int(1.25 * (
            2 * weight_bytes                      # worst case: double-buffered
            + 2 * (H + O_pad) * 4                 # biases
            + 2 * tm * D * xbytes                 # double-buffered x tiles
            + 2 * tm * O_pad * obytes             # double-buffered out tiles
            + tm * H * 4 + tm * O_pad * 4         # live f32 intermediates
        )) + (2 << 20)
        vmem_limit = min(max(est, 32 << 20), int(0.85 * cap))

        kernel = functools.partial(_mlp_kernel_resident,
                                   mm_precision=mm_precision,
                                   approximate=gelu_approximate)

        def call(weight_mode):
            wkw = {} if weight_mode is None else {"pipeline_mode": weight_mode}
            grid_spec = pltpu.PrefetchScalarGridSpec(
                num_scalar_prefetch=0,
                grid=(n_tiles,),
                in_specs=[
                    pl.BlockSpec((tm, D), lambda i: (i, 0)),          # x tile
                    pl.BlockSpec((D, H), lambda i: (0, 0), **wkw),    # W1
                    pl.BlockSpec((1, H), lambda i: (0, 0), **wkw),    # b1
                    pl.BlockSpec((H, O_pad), lambda i: (0, 0), **wkw),  # W2
                    pl.BlockSpec((1, O_pad), lambda i: (0, 0), **wkw),  # b2
                ],
                out_specs=pl.BlockSpec((tm, O_pad), lambda i: (i, 0)),
            )
            return pl.pallas_call(
                kernel,
                out_shape=jax.ShapeDtypeStruct((M, O_pad), out_dtype),
                grid_spec=grid_spec,
                compiler_params=pltpu.CompilerParams(
                    dimension_semantics=("parallel",),
                    vmem_limit_bytes=vmem_limit),
                cost_estimate=cost,
            )(x2, w1c, b1f, w2c, b2f)

        try:
            # Constant index_map => single-buffer the resident weights/biases.
            out = call(pl.Buffered(1))
        except Exception:
            out = call(None)   # builds without pipeline_mode support
    else:
        # -------- streamed-weights path (hidden dim chunked along k) ---------
        if hidden_block is not None:
            hc = _round_up(min(hidden_block, H), 128)
        else:
            per_col = 2 * (D + O_pad) * cbytes   # dbl-buffered bytes per hidden col
            hc = max(128, ((int(0.20 * cap) // per_col) // 128) * 128)
        hc = min(hc, _round_up(H, 128))
        H_pad = _round_up(H, hc)
        n_k = H_pad // hc
        if H_pad != H:
            # Zero-pad the hidden dim so padded k-chunk columns contribute 0.
            w1c = jnp.pad(w1c, ((0, 0), (0, H_pad - H)))
            b1f = jnp.pad(b1f, ((0, 0), (0, H_pad - H)))
            w2c = jnp.pad(w2c, ((0, H_pad - H), (0, 0)))

        est = int(1.25 * (
            2 * (D * hc + hc * O_pad) * cbytes    # double-buffered weight chunks
            + 2 * (hc + O_pad) * 4                # bias chunks
            + 2 * tm * D * xbytes                 # x tiles
            + 2 * tm * O_pad * obytes             # out tiles
            + tm * hc * 4 + tm * O_pad * 4        # live h chunk + acc scratch
        )) + (2 << 20)
        vmem_limit = min(max(est, 32 << 20), int(0.85 * cap))

        kernel = functools.partial(_mlp_kernel_streamed,
                                   mm_precision=mm_precision,
                                   approximate=gelu_approximate)
        out = pl.pallas_call(
            kernel,
            out_shape=jax.ShapeDtypeStruct((M, O_pad), out_dtype),
            grid_spec=pltpu.PrefetchScalarGridSpec(
                num_scalar_prefetch=0,
                grid=(n_tiles, n_k),
                in_specs=[
                    pl.BlockSpec((tm, D), lambda i, k: (i, 0)),       # x (resident across k)
                    pl.BlockSpec((D, hc), lambda i, k: (0, k)),       # W1 chunk
                    pl.BlockSpec((1, hc), lambda i, k: (0, k)),       # b1 chunk
                    pl.BlockSpec((hc, O_pad), lambda i, k: (k, 0)),   # W2 chunk
                    pl.BlockSpec((1, O_pad), lambda i, k: (0, 0)),    # b2
                ],
                out_specs=pl.BlockSpec((tm, O_pad), lambda i, k: (i, 0)),
                scratch_shapes=[pltpu.VMEM((tm, O_pad), jnp.float32)],
            ),
            compiler_params=pltpu.CompilerParams(
                dimension_semantics=("parallel", "arbitrary"),
                vmem_limit_bytes=vmem_limit),
            cost_estimate=cost,
        )(x2, w1c, b1f, w2c, b2f)

    if O_pad != O:
        out = out[:, :O]
    return out.reshape(orig_shape[:-1] + (O,))


def init_mlp_params(key, in_features, hidden_features, out_features):
    """Deterministic init mimicking nn.Linear's kaiming-uniform / bias-uniform."""
    k1, k2, k3, k4 = jax.random.split(key, 4)
    bound1 = 1.0 / math.sqrt(in_features)
    bound2 = 1.0 / math.sqrt(hidden_features)
    # PyTorch stores weight as (out, in) and computes x @ W^T; pre-transpose.
    w1_t = jax.random.uniform(k1, (hidden_features, in_features),
                              minval=-bound1, maxval=bound1, dtype=jnp.float32)
    b1 = jax.random.uniform(k2, (hidden_features,),
                            minval=-bound1, maxval=bound1, dtype=jnp.float32)
    w2_t = jax.random.uniform(k3, (out_features, hidden_features),
                              minval=-bound2, maxval=bound2, dtype=jnp.float32)
    b2 = jax.random.uniform(k4, (out_features,),
                            minval=-bound2, maxval=bound2, dtype=jnp.float32)
    return w1_t.T, b1, w2_t.T, b2


def mlp_ref(x, w1, b1, w2, b2):
    h = x @ w1 + b1
    h = 0.5 * h * (1.0 + lax.erf(h * _INV_SQRT2))
    return h @ w2 + b2


if __name__ == "__main__":
    key = jax.random.PRNGKey(0)

    # --- config 1: resident-weights path, strict f32 parity ------------------
    B, N, D, H, O = 2, 8, 32, 64, 32
    kx, kp = jax.random.split(key)
    x = jax.random.normal(kx, (B, N, D), dtype=jnp.float32)
    w1, b1, w2, b2 = init_mlp_params(kp, D, H, O)
    y_ref = mlp_ref(x.reshape(-1, D), w1, b1, w2, b2).reshape(B, N, O)

    y32 = jax.block_until_ready(
        mlp_pallas(x, w1, b1, w2, b2, compute_dtype=jnp.float32))
    assert y32.shape == (B, N, O)
    assert jnp.allclose(y32, y_ref, atol=1e-5, rtol=1e-5), "f32 mismatch vs reference"

    # --- config 2: default bf16 compute (single-pass MXU) --------------------
    y16 = jax.block_until_ready(mlp_pallas(x, w1, b1, w2, b2))
    assert jnp.allclose(y16, y_ref, atol=5e-2, rtol=5e-2), "bf16 mismatch vs reference"

    # --- config 3: ragged token count (M not a multiple of the tile) ---------
    x3 = jax.random.normal(jax.random.PRNGKey(1), (4, 5, D), dtype=jnp.float32)
    y3 = jax.block_until_ready(mlp_pallas(x3, w1, b1, w2, b2))
    y3_ref = mlp_ref(x3.reshape(-1, D), w1, b1, w2, b2).reshape(4, 5, O)
    assert jnp.allclose(y3, y3_ref, atol=5e-2, rtol=5e-2), "ragged-M mismatch"

    # --- config 4: streamed-weights path (forced hidden-dim chunking) --------
    H2 = 256
    w1s, b1s, w2s, b2s = init_mlp_params(jax.random.PRNGKey(2), D, H2, O)
    y4 = jax.block_until_ready(
        mlp_pallas(x, w1s, b1s, w2s, b2s, compute_dtype=jnp.float32,
                   hidden_block=128))
    y4_ref = mlp_ref(x.reshape(-1, D), w1s, b1s, w2s, b2s).reshape(B, N, O)
    assert jnp.allclose(y4, y4_ref, atol=1e-5, rtol=1e-5), "streamed-path mismatch"

    print("KERNEL_OK")
</pallas_src>

<mosaic_0001>
module attributes {stable_mosaic.version = 11 : i64} {
  func.func @_mlp_kernel_resident(%arg0: i32, %arg1: memref<16x32xf32, #tpu.memory_space<vmem>>, %arg2: memref<32x64xf32, #tpu.memory_space<vmem>>, %arg3: memref<1x64xf32, #tpu.memory_space<vmem>>, %arg4: memref<64x128xf32, #tpu.memory_space<vmem>>, %arg5: memref<1x128xf32, #tpu.memory_space<vmem>>, %arg6: memref<16x128xf32, #tpu.memory_space<vmem>>) attributes {dimension_semantics = [#tpu.dimension_semantics<parallel>], iteration_bounds = array<i64: 1>, scalar_prefetch = 0 : i64, scratch_operands = 0 : i64, tpu.core_type = #tpu.core_type<tc>, window_params = [{transform_indices = @transform_0, window_bounds = array<i64: 16, 32>}, {pipeline_mode = #tpu.pipeline_mode<synchronous>, transform_indices = @transform_1, window_bounds = array<i64: 32, 64>}, {pipeline_mode = #tpu.pipeline_mode<synchronous>, transform_indices = @transform_2, window_bounds = array<i64: 1, 64>}, {pipeline_mode = #tpu.pipeline_mode<synchronous>, transform_indices = @transform_3, window_bounds = array<i64: 64, 128>}, {pipeline_mode = #tpu.pipeline_mode<synchronous>, transform_indices = @transform_4, window_bounds = array<i64: 1, 128>}, {transform_indices = @transform_5, window_bounds = array<i64: 16, 128>}]} {
    %c0 = arith.constant 0 : index
    %c0_0 = arith.constant 0 : index
    %0 = vector.load %arg1[%c0, %c0_0] : memref<16x32xf32, #tpu.memory_space<vmem>>, vector<16x32xf32>
    %c0_1 = arith.constant 0 : index
    %c0_2 = arith.constant 0 : index
    %1 = vector.load %arg2[%c0_1, %c0_2] : memref<32x64xf32, #tpu.memory_space<vmem>>, vector<32x64xf32>
    %cst = arith.constant dense<0.000000e+00> : vector<16x64xf32>
    %2 = tpu.matmul %0, %1, %cst {dimension_numbers = #tpu.dot_dimension_numbers<[1], [0], [0], [1], [0, 0, 1, 1], [], []>, precision = #tpu.contract_precision<fp32>} : vector<16x32xf32>, vector<32x64xf32>, vector<16x64xf32> -> vector<16x64xf32>
    %c0_3 = arith.constant 0 : index
    %c0_4 = arith.constant 0 : index
    %3 = vector.load %arg3[%c0_3, %c0_4] : memref<1x64xf32, #tpu.memory_space<vmem>>, vector<1x64xf32>
    %4 = vector.broadcast %3 : vector<1x64xf32> to vector<16x64xf32>
    %5 = arith.addf %2, %4 : vector<16x64xf32>
    %cst_5 = arith.constant 5.000000e-01 : f32
    %6 = vector.broadcast %cst_5 : f32 to vector<16x64xf32>
    %7 = arith.mulf %6, %5 : vector<16x64xf32>
    %cst_6 = arith.constant 0.707106769 : f32
    %8 = vector.broadcast %cst_6 : f32 to vector<16x64xf32>
    %9 = arith.mulf %5, %8 : vector<16x64xf32>
    %10 = math.erf %9 : vector<16x64xf32>
    %cst_7 = arith.constant 1.000000e+00 : f32
    %11 = vector.broadcast %cst_7 : f32 to vector<16x64xf32>
    %12 = arith.addf %11, %10 : vector<16x64xf32>
    %13 = arith.mulf %7, %12 : vector<16x64xf32>
    %c0_8 = arith.constant 0 : index
    %c0_9 = arith.constant 0 : index
    %14 = vector.load %arg4[%c0_8, %c0_9] : memref<64x128xf32, #tpu.memory_space<vmem>>, vector<64x128xf32>
    %cst_10 = arith.constant dense<0.000000e+00> : vector<16x128xf32>
    %15 = tpu.matmul %13, %14, %cst_10 {dimension_numbers = #tpu.dot_dimension_numbers<[1], [0], [0], [1], [0, 0, 1, 1], [], []>, precision = #tpu.contract_precision<fp32>} : vector<16x64xf32>, vector<64x128xf32>, vector<16x128xf32> -> vector<16x128xf32>
    %c0_11 = arith.constant 0 : index
    %c0_12 = arith.constant 0 : index
    %16 = vector.load %arg5[%c0_11, %c0_12] : memref<1x128xf32, #tpu.memory_space<vmem>>, vector<1x128xf32>
    %17 = vector.broadcast %16 : vector<1x128xf32> to vector<16x128xf32>
    %18 = arith.addf %15, %17 : vector<16x128xf32>
    %c0_13 = arith.constant 0 : index
    %c0_14 = arith.constant 0 : index
    %19 = vector.load %arg6[%c0_13, %c0_14] : memref<16x128xf32, #tpu.memory_space<vmem>>, vector<16x128xf32>
    tpu.vector_store %arg6[%c0_13, %c0_14], %18 {strides = array<i32>} : memref<16x128xf32, #tpu.memory_space<vmem>>, vector<16x128xf32>,
    return
  }
  func.func @transform_0(%arg0: i32) -> (i32, i32) {
    %c0_i32 = arith.constant 0 : i32
    %c0_i32_0 = arith.constant 0 : i32
    return %arg0, %c0_i32 : i32, i32
  }
  func.func @transform_1(%arg0: i32) -> (i32, i32) {
    %c0_i32 = arith.constant 0 : i32
    %c0_i32_0 = arith.constant 0 : i32
    %c0_i32_1 = arith.constant 0 : i32
    return %c0_i32, %c0_i32_0 : i32, i32
  }
  func.func @transform_2(%arg0: i32) -> (i32, i32) {
    %c0_i32 = arith.constant 0 : i32
    %c0_i32_0 = arith.constant 0 : i32
    %c0_i32_1 = arith.constant 0 : i32
    return %c0_i32, %c0_i32_0 : i32, i32
  }
  func.func @transform_3(%arg0: i32) -> (i32, i32) {
    %c0_i32 = arith.constant 0 : i32
    %c0_i32_0 = arith.constant 0 : i32
    %c0_i32_1 = arith.constant 0 : i32
    return %c0_i32, %c0_i32_0 : i32, i32
  }
  func.func @transform_4(%arg0: i32) -> (i32, i32) {
    %c0_i32 = arith.constant 0 : i32
    %c0_i32_0 = arith.constant 0 : i32
    %c0_i32_1 = arith.constant 0 : i32
    return %c0_i32, %c0_i32_0 : i32, i32
  }
  func.func @transform_5(%arg0: i32) -> (i32, i32) {
    %c0_i32 = arith.constant 0 : i32
    %c0_i32_0 = arith.constant 0 : i32
    return %arg0, %c0_i32 : i32, i32
  }
}

module attributes {stable_mosaic.version = 11 : i64} {
  func.func @_mlp_kernel_resident(%arg0: i32, %arg1: memref<16x32xf32, #tpu.memory_space<vmem>>, %arg2: memref<32x64xf32, #tpu.memory_space<vmem>>, %arg3: memref<1x64xf32, #tpu.memory_space<vmem>>, %arg4: memref<64x128xf32, #tpu.memory_space<vmem>>, %arg5: memref<1x128xf32, #tpu.memory_space<vmem>>, %arg6: memref<16x128xf32, #tpu.memory_space<vmem>>) attributes {dimension_semantics = [#tpu.dimension_semantics<parallel>], iteration_bounds = array<i64: 1>, scalar_prefetch = 0 : i64, scratch_operands = 0 : i64, tpu.core_type = #tpu.core_type<tc>, window_params = [{transform_indices = @transform_0, window_bounds = array<i64: 16, 32>}, {pipeline_mode = #tpu.pipeline_mode<synchronous>, transform_indices = @transform_1, window_bounds = array<i64: 32, 64>}, {pipeline_mode = #tpu.pipeline_mode<synchronous>, transform_indices = @transform_2, window_bounds = array<i64: 1, 64>}, {pipeline_mode = #tpu.pipeline_mode<synchronous>, transform_indices = @transform_3, window_bounds = array<i64: 64, 128>}, {pipeline_mode = #tpu.pipeline_mode<synchronous>, transform_indices = @transform_4, window_bounds = array<i64: 1, 128>}, {transform_indices = @transform_5, window_bounds = array<i64: 16, 128>}]} {
    %c0 = arith.constant 0 : index
    %c0_0 = arith.constant 0 : index
    %0 = vector.load %arg1[%c0, %c0_0] : memref<16x32xf32, #tpu.memory_space<vmem>>, vector<16x32xf32>
    %c0_1 = arith.constant 0 : index
    %c0_2 = arith.constant 0 : index
    %1 = vector.load %arg2[%c0_1, %c0_2] : memref<32x64xf32, #tpu.memory_space<vmem>>, vector<32x64xf32>
    %cst = arith.constant dense<0.000000e+00> : vector<16x64xf32>
    %2 = tpu.matmul %0, %1, %cst {dimension_numbers = #tpu.dot_dimension_numbers<[1], [0], [0], [1], [0, 0, 1, 1], [], []>, precision = #tpu.contract_precision<fp32>} : vector<16x32xf32>, vector<32x64xf32>, vector<16x64xf32> -> vector<16x64xf32>
    %c0_3 = arith.constant 0 : index
    %c0_4 = arith.constant 0 : index
    %3 = vector.load %arg3[%c0_3, %c0_4] : memref<1x64xf32, #tpu.memory_space<vmem>>, vector<1x64xf32>
    %4 = vector.broadcast %3 : vector<1x64xf32> to vector<16x64xf32>
    %5 = arith.addf %2, %4 : vector<16x64xf32>
    %cst_5 = arith.constant 5.000000e-01 : f32
    %6 = vector.broadcast %cst_5 : f32 to vector<16x64xf32>
    %7 = arith.mulf %6, %5 : vector<16x64xf32>
    %cst_6 = arith.constant 0.707106769 : f32
    %8 = vector.broadcast %cst_6 : f32 to vector<16x64xf32>
    %9 = arith.mulf %5, %8 : vector<16x64xf32>
    %10 = math.erf %9 : vector<16x64xf32>
    %cst_7 = arith.constant 1.000000e+00 : f32
    %11 = vector.broadcast %cst_7 : f32 to vector<16x64xf32>
    %12 = arith.addf %11, %10 : vector<16x64xf32>
    %13 = arith.mulf %7, %12 : vector<16x64xf32>
    %c0_8 = arith.constant 0 : index
    %c0_9 = arith.constant 0 : index
    %14 = vector.load %arg4[%c0_8, %c0_9] : memref<64x128xf32, #tpu.memory_space<vmem>>, vector<64x128xf32>
    %cst_10 = arith.constant dense<0.000000e+00> : vector<16x128xf32>
    %15 = tpu.matmul %13, %14, %cst_10 {dimension_numbers = #tpu.dot_dimension_numbers<[1], [0], [0], [1], [0, 0, 1, 1], [], []>, precision = #tpu.contract_precision<fp32>} : vector<16x64xf32>, vector<64x128xf32>, vector<16x128xf32> -> vector<16x128xf32>
    %c0_11 = arith.constant 0 : index
    %c0_12 = arith.constant 0 : index
    %16 = vector.load %arg5[%c0_11, %c0_12] : memref<1x128xf32, #tpu.memory_space<vmem>>, vector<1x128xf32>
    %17 = vector.broadcast %16 : vector<1x128xf32> to vector<16x128xf32>
    %18 = arith.addf %15, %17 : vector<16x128xf32>
    %c0_13 = arith.constant 0 : index
    %c0_14 = arith.constant 0 : index
    %19 = vector.load %arg6[%c0_13, %c0_14] : memref<16x128xf32, #tpu.memory_space<vmem>>, vector<16x128xf32>
    tpu.vector_store %arg6[%c0_13, %c0_14], %18 {strides = array<i32>} : memref<16x128xf32, #tpu.memory_space<vmem>>, vector<16x128xf32>,
    return
  }
  func.func @transform_0(%arg0: i32) -> (i32, i32) {
    %c0_i32 = arith.constant 0 : i32
    %c0_i32_0 = arith.constant 0 : i32
    return %arg0, %c0_i32 : i32, i32
  }
  func.func @transform_1(%arg0: i32) -> (i32, i32) {
    %c0_i32 = arith.constant 0 : i32
    %c0_i32_0 = arith.constant 0 : i32
    %c0_i32_1 = arith.constant 0 : i32
    return %c0_i32, %c0_i32_0 : i32, i32
  }
  func.func @transform_2(%arg0: i32) -> (i32, i32) {
    %c0_i32 = arith.constant 0 : i32
    %c0_i32_0 = arith.constant 0 : i32
    %c0_i32_1 = arith.constant 0 : i32
    return %c0_i32, %c0_i32_0 : i32, i32
  }
  func.func @transform_3(%arg0: i32) -> (i32, i32) {
    %c0_i32 = arith.constant 0 : i32
    %c0_i32_0 = arith.constant 0 : i32
    %c0_i32_1 = arith.constant 0 : i32
    return %c0_i32, %c0_i32_0 : i32, i32
  }
  func.func @transform_4(%arg0: i32) -> (i32, i32) {
    %c0_i32 = arith.constant 0 : i32
    %c0_i32_0 = arith.constant 0 : i32
    %c0_i32_1 = arith.constant 0 : i32
    return %c0_i32, %c0_i32_0 : i32, i32
  }
  func.func @transform_5(%arg0: i32) -> (i32, i32) {
    %c0_i32 = arith.constant 0 : i32
    %c0_i32_0 = arith.constant 0 : i32
    return %arg0, %c0_i32 : i32, i32
  }
}

</mosaic_0001>

<llo_original>
// kernel: tpu_custom_call.1
$region0: #{tpu_custom_call.1}
  #allocation0 [shape = 'u32[]', space=smem, size = 0x4, offset = 0x4, fixed_abs, tag = 'smem constant byte address 0x4 - core index']
  #allocation1 [shape = 'u32[72,128]{1,0:T(1,128)}', space=vmem, size = 0x9000, scoped, tag = 'internal scratch']
  %s0 = inlined_call_operand.hbm [shape: f32[16,32], index: 0, kind: input, shape index: {}]
  %s1 = inlined_call_operand.hbm [shape: f32[32,64], index: 1, kind: input, shape index: {}]
  %s2 = inlined_call_operand.vmem [shape: f32[1,64], index: 2, kind: input, shape index: {}]
  %s3 = inlined_call_operand.hbm [shape: f32[64,128], index: 3, kind: input, shape index: {}]
  %s4 = inlined_call_operand.vmem [shape: f32[1,128], index: 4, kind: input, shape index: {}]
  %s5 = inlined_call_operand.hbm [shape: f32[16,128], index: 5, kind: output, shape index: {}]
  %s6 = sld [smem:[#allocation0]]
  $region42: #{tpu_custom_call.1} parent=0
    _
  %s8 = ssub.s32 1, %s6
  %s9 = scalar_select 0, %s8, %s6
  $region1: #{tpu_custom_call.1} parent=0
    #allocation2 [shape = 'u8[8192]{0}', space=vmem, size = 0x2000, scoped, tag = 'input window, operand 0, single buffered']
    #allocation3 [shape = 's32[1]{0}', space=sflag, size = 0x4, scoped, tag = 'scoped memory for tpu_custom_call.1']
    #allocation4 [shape = 's32[1]{0}', space=sflag, size = 0x4, scoped, tag = 'scoped memory for tpu_custom_call.1']
    #allocation5 [shape = 'u8[16384]{0}', space=vmem, size = 0x4000, scoped, tag = 'input window, operand 1, single buffered']
    #allocation6 [shape = 's32[1]{0}', space=sflag, size = 0x4, scoped, tag = 'scoped memory for tpu_custom_call.1']
    #allocation7 [shape = 'u8[32768]{0}', space=vmem, size = 0x8000, scoped, tag = 'input window, operand 3, single buffered']
    #allocation8 [shape = 'u8[8192]{0}', space=vmem, size = 0x2000, scoped, tag = 'output window, operand 0, single buffered']
    %10 = vsyncpa [#allocation3], 0
    %11 = vsyncpa [#allocation6], 0
    %12 = vsyncpa [#allocation4], 0
    // Predicated region
    $region2: #{tpu_custom_call.1} parent=1 // pred_check
      _
    $region3: #{tpu_custom_call.1} parent=1 // pred_check_branch
      %14 = sbr.rel (0) target = $region5
    $region4: #{tpu_custom_call.1} parent=1 // pred_region
      %16 = vsyncadd [#allocation3], 0
      %s17 = sshll.u32 %s0, 4
      %s18 = int_to_ptr.hbm [resolvable:$true] %s17
      %s19 = sshll.u32 [#allocation2], 4
      %s20 = int_to_ptr.vmem [resolvable:$true] %s19
      %25 = dma.hbm_to_vmem [thread:$0]  %s18, 256, %s20, [#allocation3], 128, 128, 8
    $region5: #{tpu_custom_call.1} parent=1 // pred_fallthru
      _
    // Predicated region
    $region6: #{tpu_custom_call.1} parent=1 // pred_check
      _
    $region7: #{tpu_custom_call.1} parent=1 // pred_check_branch
      %27 = sbr.rel (0) target = $region9
    $region8: #{tpu_custom_call.1} parent=1 // pred_region
      %29 = vsyncadd [#allocation6], 0
      %s30 = sshll.u32 %s1, 4
      %s31 = int_to_ptr.hbm [resolvable:$true] %s30
      %s32 = sshll.u32 [#allocation5], 4
      %s33 = int_to_ptr.vmem [resolvable:$true] %s32
      %38 = dma.hbm_to_vmem [thread:$0]  %s31, 512, %s33, [#allocation6], 128, 128, 8
    $region9: #{tpu_custom_call.1} parent=1 // pred_fallthru
      _
    // Predicated region
    $region10: #{tpu_custom_call.1} parent=1 // pred_check
      _
    $region11: #{tpu_custom_call.1} parent=1 // pred_check_branch
      %40 = sbr.rel (0) target = $region13
    $region12: #{tpu_custom_call.1} parent=1 // pred_region
      _
    $region13: #{tpu_custom_call.1} parent=1 // pred_fallthru
      _
    // Predicated region
    $region14: #{tpu_custom_call.1} parent=1 // pred_check
      _
    $region15: #{tpu_custom_call.1} parent=1 // pred_check_branch
      %42 = sbr.rel (0) target = $region17
    $region16: #{tpu_custom_call.1} parent=1 // pred_region
      %44 = vsyncadd [#allocation6], 0
      %s45 = sshll.u32 %s3, 4
      %s46 = int_to_ptr.hbm [resolvable:$true] %s45
      %s47 = sshll.u32 [#allocation7], 4
      %s48 = int_to_ptr.vmem [resolvable:$true] %s47
      %53 = dma.hbm_to_vmem [thread:$0]  %s46, 1024, %s48, [#allocation6], 128, 128, 8
    $region17: #{tpu_custom_call.1} parent=1 // pred_fallthru
      _
    // Predicated region
    $region18: #{tpu_custom_call.1} parent=1 // pred_check
      _
    $region19: #{tpu_custom_call.1} parent=1 // pred_check_branch
      %55 = sbr.rel (0) target = $region21
    $region20: #{tpu_custom_call.1} parent=1 // pred_region
      _
    $region21: #{tpu_custom_call.1} parent=1 // pred_fallthru
      _
    // Predicated region
    $region22: #{tpu_custom_call.1} parent=1 // pred_check
      _
    $region23: #{tpu_custom_call.1} parent=1 // pred_check_branch
      %57 = sbr.rel (0) target = $region25
    $region24: #{tpu_custom_call.1} parent=1 // pred_region
      %59 = dma.done [#allocation3], 256
    $region25: #{tpu_custom_call.1} parent=1 // pred_fallthru
      _
    // Predicated region
    $region26: #{tpu_custom_call.1} parent=1 // pred_check
      _
    $region27: #{tpu_custom_call.1} parent=1 // pred_check_branch
      %61 = sbr.rel (0) target = $region29
    $region28: #{tpu_custom_call.1} parent=1 // pred_region
      %63 = dma.done [#allocation6], 512
    $region29: #{tpu_custom_call.1} parent=1 // pred_fallthru
      _
    // Predicated region
    $region30: #{tpu_custom_call.1} parent=1 // pred_check
      _
    $region31: #{tpu_custom_call.1} parent=1 // pred_check_branch
      %65 = sbr.rel (0) target = $region33
    $region32: #{tpu_custom_call.1} parent=1 // pred_region
      %67 = dma.done [#allocation6], 1024
    $region33: #{tpu_custom_call.1} parent=1 // pred_fallthru
      _
    %v68 = vld [vmem:[#allocation2] sm:$0xff]
    %v69 = vld [vmem:[#allocation2 + $0x8] sm:$0xff]
    %v70 = vld [vmem:[#allocation5] sm:$0xff]
    %v71 = vld [vmem:[#allocation5 + $0x8] sm:$0xff]
    %v72 = vld [vmem:[#allocation5 + $0x10] sm:$0xff]
    %v73 = vld [vmem:[#allocation5 + $0x18] sm:$0xff]
    %v74 = vld [vmem:[%s2] sm:$0x1]
    %v76 = vperm.slane %v74, 0
    %vm78 = vcmask 261120
    %v80 = vsel %vm78, %v68, 0
    %v83 = vsel %vm78, %v69, 0
    %85 = vmatpush.msra.mxu0 0.0
    %86 = vmatpush.msra.mxu0 0.0
    %87 = vmatpush.msra.mxu0 0.0
    %88 = vmatpush.msra.mxu0 0.0
    %89 = vmatpush.msra.mxu0 0.0
    %90 = vmatpush.msra.mxu0 0.0
    %91 = vmatpush.msra.mxu0 0.0
    %92 = vmatpush.msra.mxu0 0.0
    %93 = vmatpush.msra.mxu0 0.0
    %94 = vmatpush.msra.mxu0 0.0
    %95 = vmatpush.msra.mxu0 0.0
    %96 = vmatpush.msra.mxu0 0.0
    %v97 = vand.u32 %v73, 4294901760
    %98 = vmatpush.msra.mxu0 %v97
    %v99 = vand.u32 %v72, 4294901760
    %100 = vmatpush.msra.mxu0 %v99
    %v101 = vand.u32 %v71, 4294901760
    %102 = vmatpush.msra.mxu0 %v101
    %v103 = vand.u32 %v70, 4294901760
    %104 = vmatpush.msra.mxu0 %v103
    %v105 = vand.u32 %v80, 4294901760
    %v106 = vsub.f32 %v80, %v105
    %v107 = vand.u32 %v106, 4294901760
    %v108 = vsub.f32 %v106, %v107
    %v109 = vand.u32 %v108, 4294901760
    %110 = vmatmul.f32.gmra.mxu0 %v109
    %v111 = vpop.f32.mrf.mxu0
    %v112 = vadd.f32 %v76, %v111
    %v113 = vand.u32 %v83, 4294901760
    %v114 = vsub.f32 %v83, %v113
    %v115 = vand.u32 %v114, 4294901760
    %v116 = vsub.f32 %v114, %v115
    %v117 = vand.u32 %v116, 4294901760
    %118 = vmatmul.f32.gmra.mxu0 %v117
    %v119 = vpop.f32.mrf.mxu0
    %v120 = vadd.f32 %v76, %v119
    %121 = vdwg.mxu0
    %122 = vmatpush.msra.mxu0 0.0
    %123 = vmatpush.msra.mxu0 0.0
    %124 = vmatpush.msra.mxu0 0.0
    %125 = vmatpush.msra.mxu0 0.0
    %126 = vmatpush.msra.mxu0 0.0
    %127 = vmatpush.msra.mxu0 0.0
    %128 = vmatpush.msra.mxu0 0.0
    %129 = vmatpush.msra.mxu0 0.0
    %130 = vmatpush.msra.mxu0 0.0
    %131 = vmatpush.msra.mxu0 0.0
    %132 = vmatpush.msra.mxu0 0.0
    %133 = vmatpush.msra.mxu0 0.0
    %v134 = vand.u32 %v73, 4294901760
    %v135 = vsub.f32 %v73, %v134
    %v136 = vand.u32 %v135, 4294901760
    %v137 = vsub.f32 %v135, %v136
    %v138 = vand.u32 %v137, 4294901760
    %139 = vmatpush.msra.mxu0 %v138
    %v140 = vand.u32 %v72, 4294901760
    %v141 = vsub.f32 %v72, %v140
    %v142 = vand.u32 %v141, 4294901760
    %v143 = vsub.f32 %v141, %v142
    %v144 = vand.u32 %v143, 4294901760
    %145 = vmatpush.msra.mxu0 %v144
    %v146 = vand.u32 %v71, 4294901760
    %v147 = vsub.f32 %v71, %v146
    %v148 = vand.u32 %v147, 4294901760
    %v149 = vsub.f32 %v147, %v148
    %v150 = vand.u32 %v149, 4294901760
    %151 = vmatpush.msra.mxu0 %v150
    %v152 = vand.u32 %v70, 4294901760
    %v153 = vsub.f32 %v70, %v152
    %v154 = vand.u32 %v153, 4294901760
    %v155 = vsub.f32 %v153, %v154
    %v156 = vand.u32 %v155, 4294901760
    %157 = vmatpush.msra.mxu0 %v156
    %v158 = vand.u32 %v80, 4294901760
    %159 = vmatmul.f32.gmra.mxu0 %v158
    %v160 = vpop.f32.mrf.mxu0
    %v161 = vadd.f32 %v112, %v160
    %v162 = vand.u32 %v83, 4294901760
    %163 = vmatmul.f32.gmra.mxu0 %v162
    %v164 = vpop.f32.mrf.mxu0
    %v165 = vadd.f32 %v120, %v164
    %166 = vdwg.mxu0
    %167 = vmatpush.msra.mxu0 0.0
    %168 = vmatpush.msra.mxu0 0.0
    %169 = vmatpush.msra.mxu0 0.0
    %170 = vmatpush.msra.mxu0 0.0
    %171 = vmatpush.msra.mxu0 0.0
    %172 = vmatpush.msra.mxu0 0.0
    %173 = vmatpush.msra.mxu0 0.0
    %174 = vmatpush.msra.mxu0 0.0
    %175 = vmatpush.msra.mxu0 0.0
    %176 = vmatpush.msra.mxu0 0.0
    %177 = vmatpush.msra.mxu0 0.0
    %178 = vmatpush.msra.mxu0 0.0
    %v179 = vand.u32 %v73, 4294901760
    %v180 = vsub.f32 %v73, %v179
    %181 = vmatpush.msra.mxu0 %v180
    %v182 = vand.u32 %v72, 4294901760
    %v183 = vsub.f32 %v72, %v182
    %184 = vmatpush.msra.mxu0 %v183
    %v185 = vand.u32 %v71, 4294901760
    %v186 = vsub.f32 %v71, %v185
    %187 = vmatpush.msra.mxu0 %v186
    %v188 = vand.u32 %v70, 4294901760
    %v189 = vsub.f32 %v70, %v188
    %190 = vmatpush.msra.mxu0 %v189
    %v191 = vand.u32 %v80, 4294901760
    %v192 = vsub.f32 %v80, %v191
    %193 = vmatmul.f32.gmra.mxu0 %v192
    %v194 = vpop.f32.mrf.mxu0
    %v195 = vadd.f32 %v161, %v194
    %v196 = vand.u32 %v83, 4294901760
    %v197 = vsub.f32 %v83, %v196
    %198 = vmatmul.f32.gmra.mxu0 %v197
    %v199 = vpop.f32.mrf.mxu0
    %v200 = vadd.f32 %v165, %v199
    %201 = vdwg.mxu0
    %202 = vmatpush.msra.mxu0 0.0
    %203 = vmatpush.msra.mxu0 0.0
    %204 = vmatpush.msra.mxu0 0.0
    %205 = vmatpush.msra.mxu0 0.0
    %206 = vmatpush.msra.mxu0 0.0
    %207 = vmatpush.msra.mxu0 0.0
    %208 = vmatpush.msra.mxu0 0.0
    %209 = vmatpush.msra.mxu0 0.0
    %210 = vmatpush.msra.mxu0 0.0
    %211 = vmatpush.msra.mxu0 0.0
    %212 = vmatpush.msra.mxu0 0.0
    %213 = vmatpush.msra.mxu0 0.0
    %v214 = vand.u32 %v73, 4294901760
    %215 = vmatpush.msra.mxu0 %v214
    %v216 = vand.u32 %v72, 4294901760
    %217 = vmatpush.msra.mxu0 %v216
    %v218 = vand.u32 %v71, 4294901760
    %219 = vmatpush.msra.mxu0 %v218
    %v220 = vand.u32 %v70, 4294901760
    %221 = vmatpush.msra.mxu0 %v220
    %v222 = vand.u32 %v80, 4294901760
    %v223 = vsub.f32 %v80, %v222
    %v224 = vand.u32 %v223, 4294901760
    %225 = vmatmul.f32.gmra.mxu0 %v224
    %v226 = vpop.f32.mrf.mxu0
    %v227 = vadd.f32 %v195, %v226
    %v228 = vand.u32 %v83, 4294901760
    %v229 = vsub.f32 %v83, %v228
    %v230 = vand.u32 %v229, 4294901760
    %231 = vmatmul.f32.gmra.mxu0 %v230
    %v232 = vpop.f32.mrf.mxu0
    %v233 = vadd.f32 %v200, %v232
    %234 = vdwg.mxu0
    %235 = vmatpush.msra.mxu0 0.0
    %236 = vmatpush.msra.mxu0 0.0
    %237 = vmatpush.msra.mxu0 0.0
    %238 = vmatpush.msra.mxu0 0.0
    %239 = vmatpush.msra.mxu0 0.0
    %240 = vmatpush.msra.mxu0 0.0
    %241 = vmatpush.msra.mxu0 0.0
    %242 = vmatpush.msra.mxu0 0.0
    %243 = vmatpush.msra.mxu0 0.0
    %244 = vmatpush.msra.mxu0 0.0
    %245 = vmatpush.msra.mxu0 0.0
    %246 = vmatpush.msra.mxu0 0.0
    %v247 = vand.u32 %v73, 4294901760
    %v248 = vsub.f32 %v73, %v247
    %v249 = vand.u32 %v248, 4294901760
    %250 = vmatpush.msra.mxu0 %v249
    %v251 = vand.u32 %v72, 4294901760
    %v252 = vsub.f32 %v72, %v251
    %v253 = vand.u32 %v252, 4294901760
    %254 = vmatpush.msra.mxu0 %v253
    %v255 = vand.u32 %v71, 4294901760
    %v256 = vsub.f32 %v71, %v255
    %v257 = vand.u32 %v256, 4294901760
    %258 = vmatpush.msra.mxu0 %v257
    %v259 = vand.u32 %v70, 4294901760
    %v260 = vsub.f32 %v70, %v259
    %v261 = vand.u32 %v260, 4294901760
    %262 = vmatpush.msra.mxu0 %v261
    %v263 = vand.u32 %v80, 4294901760
    %264 = vmatmul.f32.gmra.mxu0 %v263
    %v265 = vpop.f32.mrf.mxu0
    %v266 = vadd.f32 %v227, %v265
    %v267 = vand.u32 %v83, 4294901760
    %268 = vmatmul.f32.gmra.mxu0 %v267
    %v269 = vpop.f32.mrf.mxu0
    %v270 = vadd.f32 %v233, %v269
    %271 = vdwg.mxu0
    %272 = vmatpush.msra.mxu0 0.0
    %273 = vmatpush.msra.mxu0 0.0
    %274 = vmatpush.msra.mxu0 0.0
    %275 = vmatpush.msra.mxu0 0.0
    %276 = vmatpush.msra.mxu0 0.0
    %277 = vmatpush.msra.mxu0 0.0
    %278 = vmatpush.msra.mxu0 0.0
    %279 = vmatpush.msra.mxu0 0.0
    %280 = vmatpush.msra.mxu0 0.0
    %281 = vmatpush.msra.mxu0 0.0
    %282 = vmatpush.msra.mxu0 0.0
    %283 = vmatpush.msra.mxu0 0.0
    %v284 = vand.u32 %v73, 4294901760
    %285 = vmatpush.msra.mxu0 %v284
    %v286 = vand.u32 %v72, 4294901760
    %287 = vmatpush.msra.mxu0 %v286
    %v288 = vand.u32 %v71, 4294901760
    %289 = vmatpush.msra.mxu0 %v288
    %v290 = vand.u32 %v70, 4294901760
    %291 = vmatpush.msra.mxu0 %v290
    %v292 = vand.u32 %v80, 4294901760
    %293 = vmatmul.f32.gmra.mxu0 %v292
    %v294 = vpop.f32.mrf.mxu0
    %v295 = vadd.f32 %v266, %v294
    %v296 = vand.u32 %v83, 4294901760
    %297 = vmatmul.f32.gmra.mxu0 %v296
    %v298 = vpop.f32.mrf.mxu0
    %v299 = vadd.f32 %v270, %v298
    %300 = vdwg.mxu0
    %v301 = vmul.f32 %v295, 0.5
    %v302 = vmul.f32 %v299, 0.5
    %v303 = vmul.f32 %v295, 0.70710677
    %v304 = vmul.f32 %v299, 0.70710677
    %v305 = vmul.f32 %v303, %v303
    %v306 = vmin.f32 16.0, %v305
    %v307 = vmul.f32 %v306, 2.1237322e-06
    %v308 = vadd.f32 %v307, 0.00028619796
    %v309 = vmul.f32 %v306, %v308
    %v310 = vadd.f32 %v309, 0.0036580483
    %v311 = vmul.f32 %v306, %v310
    %v312 = vadd.f32 %v311, 0.05243302
    %v313 = vmul.f32 %v306, %v312
    %v314 = vadd.f32 %v313, 0.18741608
    %v315 = vmul.f32 %v306, %v314
    %v316 = vadd.f32 %v315, 1.1283791
    %v317 = vmul.f32 %v303, %v316
    %v318 = vmul.f32 %v306, 3.8918573e-05
    %v319 = vadd.f32 %v318, 0.001143296
    %v320 = vmul.f32 %v306, %v319
    %v321 = vadd.f32 %v320, 0.014752088
    %v322 = vmul.f32 %v306, %v321
    %v323 = vadd.f32 %v322, 0.112945676
    %v324 = vmul.f32 %v306, %v323
    %v325 = vadd.f32 %v324, 0.4994258
    %v326 = vmul.f32 %v306, %v325
    %v327 = vadd.f32 %v326, 1.0
    %v328 = vrcp.pop %v327
    %v329 = vmul.f32 %v327, %v328
    %v330 = vsub.f32 1.0, %v329
    %v331 = vmul.f32 %v328, %v330
    %v332 = vadd.f32 %v328, %v331
    %vm333 = vweird.f32 %v327
    %vm334 = vweird.f32 %v328
    %vm335 = vmor %vm333, %vm334
    %v336 = vsel %vm335, %v328, %v332
    %v337 = vand.u32 2147483647, %v327
    %vm338 = vcmp.eq.f32.partialorder %v337, 8.507059e+37
    %v339 = vand.u32 %v327, 2147483648
    %v340 = vor.u32 1.1754944e-38, %v339
    %v341 = vsel %vm338, %v340, %v336
    %v342 = vmul.f32 %v317, %v341
    %v343 = vmin.f32 %v342, 1.0
    %v344 = vmax.f32 %v343, -1.0
    %v345 = vmul.f32 %v304, %v304
    %v346 = vmin.f32 16.0, %v345
    %v347 = vmul.f32 %v346, 2.1237322e-06
    %v348 = vadd.f32 %v347, 0.00028619796
    %v349 = vmul.f32 %v346, %v348
    %v350 = vadd.f32 %v349, 0.0036580483
    %v351 = vmul.f32 %v346, %v350
    %v352 = vadd.f32 %v351, 0.05243302
    %v353 = vmul.f32 %v346, %v352
    %v354 = vadd.f32 %v353, 0.18741608
    %v355 = vmul.f32 %v346, %v354
    %v356 = vadd.f32 %v355, 1.1283791
    %v357 = vmul.f32 %v304, %v356
    %v358 = vmul.f32 %v346, 3.8918573e-05
    %v359 = vadd.f32 %v358, 0.001143296
    %v360 = vmul.f32 %v346, %v359
    %v361 = vadd.f32 %v360, 0.014752088
    %v362 = vmul.f32 %v346, %v361
    %v363 = vadd.f32 %v362, 0.112945676
    %v364 = vmul.f32 %v346, %v363
    %v365 = vadd.f32 %v364, 0.4994258
    %v366 = vmul.f32 %v346, %v365
    %v367 = vadd.f32 %v366, 1.0
    %v368 = vrcp.pop %v367
    %v369 = vmul.f32 %v367, %v368
    %v370 = vsub.f32 1.0, %v369
    %v371 = vmul.f32 %v368, %v370
    %v372 = vadd.f32 %v368, %v371
    %vm373 = vweird.f32 %v367
    %vm374 = vweird.f32 %v368
    %vm375 = vmor %vm373, %vm374
    %v376 = vsel %vm375, %v368, %v372
    %v377 = vand.u32 2147483647, %v367
    %vm378 = vcmp.eq.f32.partialorder %v377, 8.507059e+37
    %v379 = vand.u32 %v367, 2147483648
    %v380 = vor.u32 1.1754944e-38, %v379
    %v381 = vsel %vm378, %v380, %v376
    %v382 = vmul.f32 %v357, %v381
    %v383 = vmin.f32 %v382, 1.0
    %v384 = vmax.f32 %v383, -1.0
    %v385 = vadd.f32 %v344, 1.0
    %v386 = vadd.f32 %v384, 1.0
    %v387 = vmul.f32 %v301, %v385
    %v388 = vmul.f32 %v302, %v386
    %v389 = vld [vmem:[#allocation7] sm:$0xff]
    %v390 = vld [vmem:[#allocation7 + $0x8] sm:$0xff]
    %v391 = vld [vmem:[#allocation7 + $0x10] sm:$0xff]
    %v392 = vld [vmem:[#allocation7 + $0x18] sm:$0xff]
    %v393 = vld [vmem:[#allocation7 + $0x20] sm:$0xff]
    %v394 = vld [vmem:[#allocation7 + $0x28] sm:$0xff]
    %v395 = vld [vmem:[#allocation7 + $0x30] sm:$0xff]
    %v396 = vld [vmem:[#allocation7 + $0x38] sm:$0xff]
    %v397 = vld [vmem:[%s4] sm:$0x1]
    %v399 = vperm.slane %v397, 0
    %vm401 = vcmask 523264
    %v403 = vsel %vm401, %v387, 0
    %v406 = vsel %vm401, %v388, 0
    %408 = vmatpush.msra.mxu0 0.0
    %409 = vmatpush.msra.mxu0 0.0
    %410 = vmatpush.msra.mxu0 0.0
    %411 = vmatpush.msra.mxu0 0.0
    %412 = vmatpush.msra.mxu0 0.0
    %413 = vmatpush.msra.mxu0 0.0
    %414 = vmatpush.msra.mxu0 0.0
    %415 = vmatpush.msra.mxu0 0.0
    %v416 = vand.u32 %v396, 4294901760
    %417 = vmatpush.msra.mxu0 %v416
    %v418 = vand.u32 %v395, 4294901760
    %419 = vmatpush.msra.mxu0 %v418
    %v420 = vand.u32 %v394, 4294901760
    %421 = vmatpush.msra.mxu0 %v420
    %v422 = vand.u32 %v393, 4294901760
    %423 = vmatpush.msra.mxu0 %v422
    %v424 = vand.u32 %v392, 4294901760
    %425 = vmatpush.msra.mxu0 %v424
    %v426 = vand.u32 %v391, 4294901760
    %427 = vmatpush.msra.mxu0 %v426
    %v428 = vand.u32 %v390, 4294901760
    %429 = vmatpush.msra.mxu0 %v428
    %v430 = vand.u32 %v389, 4294901760
    %431 = vmatpush.msra.mxu0 %v430
    %v432 = vand.u32 %v403, 4294901760
    %v433 = vsub.f32 %v403, %v432
    %v434 = vand.u32 %v433, 4294901760
    %v435 = vsub.f32 %v433, %v434
    %v436 = vand.u32 %v435, 4294901760
    %437 = vmatmul.f32.gmra.mxu0 %v436
    %v438 = vpop.f32.mrf.mxu0
    %v439 = vadd.f32 %v399, %v438
    %v440 = vand.u32 %v406, 4294901760
    %v441 = vsub.f32 %v406, %v440
    %v442 = vand.u32 %v441, 4294901760
    %v443 = vsub.f32 %v441, %v442
    %v444 = vand.u32 %v443, 4294901760
    %445 = vmatmul.f32.gmra.mxu0 %v444
    %v446 = vpop.f32.mrf.mxu0
    %v447 = vadd.f32 %v399, %v446
    %448 = vdwg.mxu0
    %449 = vmatpush.msra.mxu0 0.0
    %450 = vmatpush.msra.mxu0 0.0
    %451 = vmatpush.msra.mxu0 0.0
    %452 = vmatpush.msra.mxu0 0.0
    %453 = vmatpush.msra.mxu0 0.0
    %454 = vmatpush.msra.mxu0 0.0
    %455 = vmatpush.msra.mxu0 0.0
    %456 = vmatpush.msra.mxu0 0.0
    %v457 = vand.u32 %v396, 4294901760
    %v458 = vsub.f32 %v396, %v457
    %v459 = vand.u32 %v458, 4294901760
    %v460 = vsub.f32 %v458, %v459
    %v461 = vand.u32 %v460, 4294901760
    %462 = vmatpush.msra.mxu0 %v461
    %v463 = vand.u32 %v395, 4294901760
    %v464 = vsub.f32 %v395, %v463
    %v465 = vand.u32 %v464, 4294901760
    %v466 = vsub.f32 %v464, %v465
    %v467 = vand.u32 %v466, 4294901760
    %468 = vmatpush.msra.mxu0 %v467
    %v469 = vand.u32 %v394, 4294901760
    %v470 = vsub.f32 %v394, %v469
    %v471 = vand.u32 %v470, 4294901760
    %v472 = vsub.f32 %v470, %v471
    %v473 = vand.u32 %v472, 4294901760
    %474 = vmatpush.msra.mxu0 %v473
    %v475 = vand.u32 %v393, 4294901760
    %v476 = vsub.f32 %v393, %v475
    %v477 = vand.u32 %v476, 4294901760
    %v478 = vsub.f32 %v476, %v477
    %v479 = vand.u32 %v478, 4294901760
    %480 = vmatpush.msra.mxu0 %v479
    %v481 = vand.u32 %v392, 4294901760
    %v482 = vsub.f32 %v392, %v481
    %v483 = vand.u32 %v482, 4294901760
    %v484 = vsub.f32 %v482, %v483
    %v485 = vand.u32 %v484, 4294901760
    %486 = vmatpush.msra.mxu0 %v485
    %v487 = vand.u32 %v391, 4294901760
    %v488 = vsub.f32 %v391, %v487
    %v489 = vand.u32 %v488, 4294901760
    %v490 = vsub.f32 %v488, %v489
    %v491 = vand.u32 %v490, 4294901760
    %492 = vmatpush.msra.mxu0 %v491
    %v493 = vand.u32 %v390, 4294901760
    %v494 = vsub.f32 %v390, %v493
    %v495 = vand.u32 %v494, 4294901760
    %v496 = vsub.f32 %v494, %v495
    %v497 = vand.u32 %v496, 4294901760
    %498 = vmatpush.msra.mxu0 %v497
    %v499 = vand.u32 %v389, 4294901760
    %v500 = vsub.f32 %v389, %v499
    %v501 = vand.u32 %v500, 4294901760
    %v502 = vsub.f32 %v500, %v501
    %v503 = vand.u32 %v502, 4294901760
    %504 = vmatpush.msra.mxu0 %v503
    %v505 = vand.u32 %v403, 4294901760
    %506 = vmatmul.f32.gmra.mxu0 %v505
    %v507 = vpop.f32.mrf.mxu0
    %v508 = vadd.f32 %v439, %v507
    %v509 = vand.u32 %v406, 4294901760
    %510 = vmatmul.f32.gmra.mxu0 %v509
    %v511 = vpop.f32.mrf.mxu0
    %v512 = vadd.f32 %v447, %v511
    %513 = vdwg.mxu0
    %514 = vmatpush.msra.mxu0 0.0
    %515 = vmatpush.msra.mxu0 0.0
    %516 = vmatpush.msra.mxu0 0.0
    %517 = vmatpush.msra.mxu0 0.0
    %518 = vmatpush.msra.mxu0 0.0
    %519 = vmatpush.msra.mxu0 0.0
    %520 = vmatpush.msra.mxu0 0.0
    %521 = vmatpush.msra.mxu0 0.0
    %v522 = vand.u32 %v396, 4294901760
    %v523 = vsub.f32 %v396, %v522
    %524 = vmatpush.msra.mxu0 %v523
    %v525 = vand.u32 %v395, 4294901760
    %v526 = vsub.f32 %v395, %v525
    %527 = vmatpush.msra.mxu0 %v526
    %v528 = vand.u32 %v394, 4294901760
    %v529 = vsub.f32 %v394, %v528
    %530 = vmatpush.msra.mxu0 %v529
    %v531 = vand.u32 %v393, 4294901760
    %v532 = vsub.f32 %v393, %v531
    %533 = vmatpush.msra.mxu0 %v532
    %v534 = vand.u32 %v392, 4294901760
    %v535 = vsub.f32 %v392, %v534
    %536 = vmatpush.msra.mxu0 %v535
    %v537 = vand.u32 %v391, 4294901760
    %v538 = vsub.f32 %v391, %v537
    %539 = vmatpush.msra.mxu0 %v538
    %v540 = vand.u32 %v390, 4294901760
    %v541 = vsub.f32 %v390, %v540
    %542 = vmatpush.msra.mxu0 %v541
    %v543 = vand.u32 %v389, 4294901760
    %v544 = vsub.f32 %v389, %v543
    %545 = vmatpush.msra.mxu0 %v544
    %v546 = vand.u32 %v403, 4294901760
    %v547 = vsub.f32 %v403, %v546
    %548 = vmatmul.f32.gmra.mxu0 %v547
    %v549 = vpop.f32.mrf.mxu0
    %v550 = vadd.f32 %v508, %v549
    %v551 = vand.u32 %v406, 4294901760
    %v552 = vsub.f32 %v406, %v551
    %553 = vmatmul.f32.gmra.mxu0 %v552
    %v554 = vpop.f32.mrf.mxu0
    %v555 = vadd.f32 %v512, %v554
    %556 = vdwg.mxu0
    %557 = vmatpush.msra.mxu0 0.0
    %558 = vmatpush.msra.mxu0 0.0
    %559 = vmatpush.msra.mxu0 0.0
    %560 = vmatpush.msra.mxu0 0.0
    %561 = vmatpush.msra.mxu0 0.0
    %562 = vmatpush.msra.mxu0 0.0
    %563 = vmatpush.msra.mxu0 0.0
    %564 = vmatpush.msra.mxu0 0.0
    %v565 = vand.u32 %v396, 4294901760
    %566 = vmatpush.msra.mxu0 %v565
    %v567 = vand.u32 %v395, 4294901760
    %568 = vmatpush.msra.mxu0 %v567
    %v569 = vand.u32 %v394, 4294901760
    %570 = vmatpush.msra.mxu0 %v569
    %v571 = vand.u32 %v393, 4294901760
    %572 = vmatpush.msra.mxu0 %v571
    %v573 = vand.u32 %v392, 4294901760
    %574 = vmatpush.msra.mxu0 %v573
    %v575 = vand.u32 %v391, 4294901760
    %576 = vmatpush.msra.mxu0 %v575
    %v577 = vand.u32 %v390, 4294901760
    %578 = vmatpush.msra.mxu0 %v577
    %v579 = vand.u32 %v389, 4294901760
    %580 = vmatpush.msra.mxu0 %v579
    %v581 = vand.u32 %v403, 4294901760
    %v582 = vsub.f32 %v403, %v581
    %v583 = vand.u32 %v582, 4294901760
    %584 = vmatmul.f32.gmra.mxu0 %v583
    %v585 = vpop.f32.mrf.mxu0
    %v586 = vadd.f32 %v550, %v585
    %v587 = vand.u32 %v406, 4294901760
    %v588 = vsub.f32 %v406, %v587
    %v589 = vand.u32 %v588, 4294901760
    %590 = vmatmul.f32.gmra.mxu0 %v589
    %v591 = vpop.f32.mrf.mxu0
    %v592 = vadd.f32 %v555, %v591
    %593 = vdwg.mxu0
    %594 = vmatpush.msra.mxu0 0.0
    %595 = vmatpush.msra.mxu0 0.0
    %596 = vmatpush.msra.mxu0 0.0
    %597 = vmatpush.msra.mxu0 0.0
    %598 = vmatpush.msra.mxu0 0.0
    %599 = vmatpush.msra.mxu0 0.0
    %600 = vmatpush.msra.mxu0 0.0
    %601 = vmatpush.msra.mxu0 0.0
    %v602 = vand.u32 %v396, 4294901760
    %v603 = vsub.f32 %v396, %v602
    %v604 = vand.u32 %v603, 4294901760
    %605 = vmatpush.msra.mxu0 %v604
    %v606 = vand.u32 %v395, 4294901760
    %v607 = vsub.f32 %v395, %v606
    %v608 = vand.u32 %v607, 4294901760
    %609 = vmatpush.msra.mxu0 %v608
    %v610 = vand.u32 %v394, 4294901760
    %v611 = vsub.f32 %v394, %v610
    %v612 = vand.u32 %v611, 4294901760
    %613 = vmatpush.msra.mxu0 %v612
    %v614 = vand.u32 %v393, 4294901760
    %v615 = vsub.f32 %v393, %v614
    %v616 = vand.u32 %v615, 4294901760
    %617 = vmatpush.msra.mxu0 %v616
    %v618 = vand.u32 %v392, 4294901760
    %v619 = vsub.f32 %v392, %v618
    %v620 = vand.u32 %v619, 4294901760
    %621 = vmatpush.msra.mxu0 %v620
    %v622 = vand.u32 %v391, 4294901760
    %v623 = vsub.f32 %v391, %v622
    %v624 = vand.u32 %v623, 4294901760
    %625 = vmatpush.msra.mxu0 %v624
    %v626 = vand.u32 %v390, 4294901760
    %v627 = vsub.f32 %v390, %v626
    %v628 = vand.u32 %v627, 4294901760
    %629 = vmatpush.msra.mxu0 %v628
    %v630 = vand.u32 %v389, 4294901760
    %v631 = vsub.f32 %v389, %v630
    %v632 = vand.u32 %v631, 4294901760
    %633 = vmatpush.msra.mxu0 %v632
    %v634 = vand.u32 %v403, 4294901760
    %635 = vmatmul.f32.gmra.mxu0 %v634
    %v636 = vpop.f32.mrf.mxu0
    %v637 = vadd.f32 %v586, %v636
    %v638 = vand.u32 %v406, 4294901760
    %639 = vmatmul.f32.gmra.mxu0 %v638
    %v640 = vpop.f32.mrf.mxu0
    %v641 = vadd.f32 %v592, %v640
    %642 = vdwg.mxu0
    %643 = vmatpush.msra.mxu0 0.0
    %644 = vmatpush.msra.mxu0 0.0
    %645 = vmatpush.msra.mxu0 0.0
    %646 = vmatpush.msra.mxu0 0.0
    %647 = vmatpush.msra.mxu0 0.0
    %648 = vmatpush.msra.mxu0 0.0
    %649 = vmatpush.msra.mxu0 0.0
    %650 = vmatpush.msra.mxu0 0.0
    %v651 = vand.u32 %v396, 4294901760
    %652 = vmatpush.msra.mxu0 %v651
    %v653 = vand.u32 %v395, 4294901760
    %654 = vmatpush.msra.mxu0 %v653
    %v655 = vand.u32 %v394, 4294901760
    %656 = vmatpush.msra.mxu0 %v655
    %v657 = vand.u32 %v393, 4294901760
    %658 = vmatpush.msra.mxu0 %v657
    %v659 = vand.u32 %v392, 4294901760
    %660 = vmatpush.msra.mxu0 %v659
    %v661 = vand.u32 %v391, 4294901760
    %662 = vmatpush.msra.mxu0 %v661
    %v663 = vand.u32 %v390, 4294901760
    %664 = vmatpush.msra.mxu0 %v663
    %v665 = vand.u32 %v389, 4294901760
    %666 = vmatpush.msra.mxu0 %v665
    %v667 = vand.u32 %v403, 4294901760
    %668 = vmatmul.f32.gmra.mxu0 %v667
    %v669 = vpop.f32.mrf.mxu0
    %v670 = vadd.f32 %v637, %v669
    %v671 = vand.u32 %v406, 4294901760
    %672 = vmatmul.f32.gmra.mxu0 %v671
    %v673 = vpop.f32.mrf.mxu0
    %v674 = vadd.f32 %v641, %v673
    %675 = vdwg.mxu0
    %676 = vst [vmem:[#allocation8] sm:$0xff] %v670
    %677 = vst [vmem:[#allocation8 + $0x8] sm:$0xff] %v674
    // Predicated region
    $region34: #{tpu_custom_call.1} parent=1 // pred_check
      _
    $region35: #{tpu_custom_call.1} parent=1 // pred_check_branch
      %679 = sbr.rel (0) target = $region37
    $region36: #{tpu_custom_call.1} parent=1 // pred_region
      %681 = vsyncadd [#allocation4], 0
      %s682 = sshll.u32 [#allocation8], 4
      %s683 = int_to_ptr.vmem [resolvable:$true] %s682
      %s684 = sshll.u32 %s5, 4
      %s685 = int_to_ptr.hbm [resolvable:$true] %s684
      %690 = dma.vmem_to_hbm [thread:$0]  %s683, 256, %s685, [#allocation4], 128, 128, 8
    $region37: #{tpu_custom_call.1} parent=1 // pred_fallthru
      _
    // Predicated region
    $region38: #{tpu_custom_call.1} parent=1 // pred_check
      _
    $region39: #{tpu_custom_call.1} parent=1 // pred_check_branch
      %692 = sbr.rel (0) target = $region41
    $region40: #{tpu_custom_call.1} parent=1 // pred_region
      %694 = dma.done [#allocation4], 256
    $region41: #{tpu_custom_call.1} parent=1 // pred_fallthru
      _
    %695 = vsyncpa [#allocation3], 1
    %696 = vsyncpa [#allocation6], 1
    %697 = vsyncpa [#allocation4], 1

// kernel: tpu_custom_call.1
$region0: #{tpu_custom_call.1}
  #allocation0 [shape = 'u32[]', space=smem, size = 0x4, offset = 0x4, fixed_abs, tag = 'smem constant byte address 0x4 - core index']
  #allocation1 [shape = 'u32[72,128]{1,0:T(1,128)}', space=vmem, size = 0x9000, scoped, tag = 'internal scratch']
  %s0 = inlined_call_operand.hbm [shape: f32[16,32], index: 0, kind: input, shape index: {}]
  %s1 = inlined_call_operand.hbm [shape: f32[32,64], index: 1, kind: input, shape index: {}]
  %s2 = inlined_call_operand.vmem [shape: f32[1,64], index: 2, kind: input, shape index: {}]
  %s3 = inlined_call_operand.hbm [shape: f32[64,128], index: 3, kind: input, shape index: {}]
  %s4 = inlined_call_operand.vmem [shape: f32[1,128], index: 4, kind: input, shape index: {}]
  %s5 = inlined_call_operand.hbm [shape: f32[16,128], index: 5, kind: output, shape index: {}]
  %s6 = sld [smem:[#allocation0]]
  $region42: #{tpu_custom_call.1} parent=0
    _
  %s8 = ssub.s32 1, %s6
  %s9 = scalar_select 0, %s8, %s6
  $region1: #{tpu_custom_call.1} parent=0
    #allocation2 [shape = 'u8[8192]{0}', space=vmem, size = 0x2000, scoped, tag = 'input window, operand 0, single buffered']
    #allocation3 [shape = 's32[1]{0}', space=sflag, size = 0x4, scoped, tag = 'scoped memory for tpu_custom_call.1']
    #allocation4 [shape = 's32[1]{0}', space=sflag, size = 0x4, scoped, tag = 'scoped memory for tpu_custom_call.1']
    #allocation5 [shape = 'u8[16384]{0}', space=vmem, size = 0x4000, scoped, tag = 'input window, operand 1, single buffered']
    #allocation6 [shape = 's32[1]{0}', space=sflag, size = 0x4, scoped, tag = 'scoped memory for tpu_custom_call.1']
    #allocation7 [shape = 'u8[32768]{0}', space=vmem, size = 0x8000, scoped, tag = 'input window, operand 3, single buffered']
    #allocation8 [shape = 'u8[8192]{0}', space=vmem, size = 0x2000, scoped, tag = 'output window, operand 0, single buffered']
    %10 = vsyncpa [#allocation3], 0
    %11 = vsyncpa [#allocation6], 0
    %12 = vsyncpa [#allocation4], 0
    // Predicated region
    $region2: #{tpu_custom_call.1} parent=1 // pred_check
      _
    $region3: #{tpu_custom_call.1} parent=1 // pred_check_branch
      %14 = sbr.rel (0) target = $region5
    $region4: #{tpu_custom_call.1} parent=1 // pred_region
      %16 = vsyncadd [#allocation3], 0
      %s17 = sshll.u32 %s0, 4
      %s18 = int_to_ptr.hbm [resolvable:$true] %s17
      %s19 = sshll.u32 [#allocation2], 4
      %s20 = int_to_ptr.vmem [resolvable:$true] %s19
      %25 = dma.hbm_to_vmem [thread:$0]  %s18, 256, %s20, [#allocation3], 128, 128, 8
    $region5: #{tpu_custom_call.1} parent=1 // pred_fallthru
      _
    // Predicated region
    $region6: #{tpu_custom_call.1} parent=1 // pred_check
      _
    $region7: #{tpu_custom_call.1} parent=1 // pred_check_branch
      %27 = sbr.rel (0) target = $region9
    $region8: #{tpu_custom_call.1} parent=1 // pred_region
      %29 = vsyncadd [#allocation6], 0
      %s30 = sshll.u32 %s1, 4
      %s31 = int_to_ptr.hbm [resolvable:$true] %s30
      %s32 = sshll.u32 [#allocation5], 4
      %s33 = int_to_ptr.vmem [resolvable:$true] %s32
      %38 = dma.hbm_to_vmem [thread:$0]  %s31, 512, %s33, [#allocation6], 128, 128, 8
    $region9: #{tpu_custom_call.1} parent=1 // pred_fallthru
      _
    // Predicated region
    $region10: #{tpu_custom_call.1} parent=1 // pred_check
      _
    $region11: #{tpu_custom_call.1} parent=1 // pred_check_branch
      %40 = sbr.rel (0) target = $region13
    $region12: #{tpu_custom_call.1} parent=1 // pred_region
      _
    $region13: #{tpu_custom_call.1} parent=1 // pred_fallthru
      _
    // Predicated region
    $region14: #{tpu_custom_call.1} parent=1 // pred_check
      _
    $region15: #{tpu_custom_call.1} parent=1 // pred_check_branch
      %42 = sbr.rel (0) target = $region17
    $region16: #{tpu_custom_call.1} parent=1 // pred_region
      %44 = vsyncadd [#allocation6], 0
      %s45 = sshll.u32 %s3, 4
      %s46 = int_to_ptr.hbm [resolvable:$true] %s45
      %s47 = sshll.u32 [#allocation7], 4
      %s48 = int_to_ptr.vmem [resolvable:$true] %s47
      %53 = dma.hbm_to_vmem [thread:$0]  %s46, 1024, %s48, [#allocation6], 128, 128, 8
    $region17: #{tpu_custom_call.1} parent=1 // pred_fallthru
      _
    // Predicated region
    $region18: #{tpu_custom_call.1} parent=1 // pred_check
      _
    $region19: #{tpu_custom_call.1} parent=1 // pred_check_branch
      %55 = sbr.rel (0) target = $region21
    $region20: #{tpu_custom_call.1} parent=1 // pred_region
      _
    $region21: #{tpu_custom_call.1} parent=1 // pred_fallthru
      _
    // Predicated region
    $region22: #{tpu_custom_call.1} parent=1 // pred_check
      _
    $region23: #{tpu_custom_call.1} parent=1 // pred_check_branch
      %57 = sbr.rel (0) target = $region25
    $region24: #{tpu_custom_call.1} parent=1 // pred_region
      %59 = dma.done [#allocation3], 256
    $region25: #{tpu_custom_call.1} parent=1 // pred_fallthru
      _
    // Predicated region
    $region26: #{tpu_custom_call.1} parent=1 // pred_check
      _
    $region27: #{tpu_custom_call.1} parent=1 // pred_check_branch
      %61 = sbr.rel (0) target = $region29
    $region28: #{tpu_custom_call.1} parent=1 // pred_region
      %63 = dma.done [#allocation6], 512
    $region29: #{tpu_custom_call.1} parent=1 // pred_fallthru
      _
    // Predicated region
    $region30: #{tpu_custom_call.1} parent=1 // pred_check
      _
    $region31: #{tpu_custom_call.1} parent=1 // pred_check_branch
      %65 = sbr.rel (0) target = $region33
    $region32: #{tpu_custom_call.1} parent=1 // pred_region
      %67 = dma.done [#allocation6], 1024
    $region33: #{tpu_custom_call.1} parent=1 // pred_fallthru
      _
    %v68 = vld [vmem:[#allocation2] sm:$0xff]
    %v69 = vld [vmem:[#allocation2 + $0x8] sm:$0xff]
    %v70 = vld [vmem:[#allocation5] sm:$0xff]
    %v71 = vld [vmem:[#allocation5 + $0x8] sm:$0xff]
    %v72 = vld [vmem:[#allocation5 + $0x10] sm:$0xff]
    %v73 = vld [vmem:[#allocation5 + $0x18] sm:$0xff]
    %v74 = vld [vmem:[%s2] sm:$0x1]
    %v76 = vperm.slane %v74, 0
    %vm78 = vcmask 261120
    %v80 = vsel %vm78, %v68, 0
    %v83 = vsel %vm78, %v69, 0
    %85 = vmatpush.msra.mxu0 0.0
    %86 = vmatpush.msra.mxu0 0.0
    %87 = vmatpush.msra.mxu0 0.0
    %88 = vmatpush.msra.mxu0 0.0
    %89 = vmatpush.msra.mxu0 0.0
    %90 = vmatpush.msra.mxu0 0.0
    %91 = vmatpush.msra.mxu0 0.0
    %92 = vmatpush.msra.mxu0 0.0
    %93 = vmatpush.msra.mxu0 0.0
    %94 = vmatpush.msra.mxu0 0.0
    %95 = vmatpush.msra.mxu0 0.0
    %96 = vmatpush.msra.mxu0 0.0
    %v97 = vand.u32 %v73, 4294901760
    %98 = vmatpush.msra.mxu0 %v97
    %v99 = vand.u32 %v72, 4294901760
    %100 = vmatpush.msra.mxu0 %v99
    %v101 = vand.u32 %v71, 4294901760
    %102 = vmatpush.msra.mxu0 %v101
    %v103 = vand.u32 %v70, 4294901760
    %104 = vmatpush.msra.mxu0 %v103
    %v105 = vand.u32 %v80, 4294901760
    %v106 = vsub.f32 %v80, %v105
    %v107 = vand.u32 %v106, 4294901760
    %v108 = vsub.f32 %v106, %v107
    %v109 = vand.u32 %v108, 4294901760
    %110 = vmatmul.f32.gmra.mxu0 %v109
    %v111 = vpop.f32.mrf.mxu0
    %v112 = vadd.f32 %v76, %v111
    %v113 = vand.u32 %v83, 4294901760
    %v114 = vsub.f32 %v83, %v113
    %v115 = vand.u32 %v114, 4294901760
    %v116 = vsub.f32 %v114, %v115
    %v117 = vand.u32 %v116, 4294901760
    %118 = vmatmul.f32.gmra.mxu0 %v117
    %v119 = vpop.f32.mrf.mxu0
    %v120 = vadd.f32 %v76, %v119
    %121 = vdwg.mxu0
    %122 = vmatpush.msra.mxu0 0.0
    %123 = vmatpush.msra.mxu0 0.0
    %124 = vmatpush.msra.mxu0 0.0
    %125 = vmatpush.msra.mxu0 0.0
    %126 = vmatpush.msra.mxu0 0.0
    %127 = vmatpush.msra.mxu0 0.0
    %128 = vmatpush.msra.mxu0 0.0
    %129 = vmatpush.msra.mxu0 0.0
    %130 = vmatpush.msra.mxu0 0.0
    %131 = vmatpush.msra.mxu0 0.0
    %132 = vmatpush.msra.mxu0 0.0
    %133 = vmatpush.msra.mxu0 0.0
    %v134 = vand.u32 %v73, 4294901760
    %v135 = vsub.f32 %v73, %v134
    %v136 = vand.u32 %v135, 4294901760
    %v137 = vsub.f32 %v135, %v136
    %v138 = vand.u32 %v137, 4294901760
    %139 = vmatpush.msra.mxu0 %v138
    %v140 = vand.u32 %v72, 4294901760
    %v141 = vsub.f32 %v72, %v140
    %v142 = vand.u32 %v141, 4294901760
    %v143 = vsub.f32 %v141, %v142
    %v144 = vand.u32 %v143, 4294901760
    %145 = vmatpush.msra.mxu0 %v144
    %v146 = vand.u32 %v71, 4294901760
    %v147 = vsub.f32 %v71, %v146
    %v148 = vand.u32 %v147, 4294901760
    %v149 = vsub.f32 %v147, %v148
    %v150 = vand.u32 %v149, 4294901760
    %151 = vmatpush.msra.mxu0 %v150
    %v152 = vand.u32 %v70, 4294901760
    %v153 = vsub.f32 %v70, %v152
    %v154 = vand.u32 %v153, 4294901760
    %v155 = vsub.f32 %v153, %v154
    %v156 = vand.u32 %v155, 4294901760
    %157 = vmatpush.msra.mxu0 %v156
    %v158 = vand.u32 %v80, 4294901760
    %159 = vmatmul.f32.gmra.mxu0 %v158
    %v160 = vpop.f32.mrf.mxu0
    %v161 = vadd.f32 %v112, %v160
    %v162 = vand.u32 %v83, 4294901760
    %163 = vmatmul.f32.gmra.mxu0 %v162
    %v164 = vpop.f32.mrf.mxu0
    %v165 = vadd.f32 %v120, %v164
    %166 = vdwg.mxu0
    %167 = vmatpush.msra.mxu0 0.0
    %168 = vmatpush.msra.mxu0 0.0
    %169 = vmatpush.msra.mxu0 0.0
    %170 = vmatpush.msra.mxu0 0.0
    %171 = vmatpush.msra.mxu0 0.0
    %172 = vmatpush.msra.mxu0 0.0
    %173 = vmatpush.msra.mxu0 0.0
    %174 = vmatpush.msra.mxu0 0.0
    %175 = vmatpush.msra.mxu0 0.0
    %176 = vmatpush.msra.mxu0 0.0
    %177 = vmatpush.msra.mxu0 0.0
    %178 = vmatpush.msra.mxu0 0.0
    %v179 = vand.u32 %v73, 4294901760
    %v180 = vsub.f32 %v73, %v179
    %181 = vmatpush.msra.mxu0 %v180
    %v182 = vand.u32 %v72, 4294901760
    %v183 = vsub.f32 %v72, %v182
    %184 = vmatpush.msra.mxu0 %v183
    %v185 = vand.u32 %v71, 4294901760
    %v186 = vsub.f32 %v71, %v185
    %187 = vmatpush.msra.mxu0 %v186
    %v188 = vand.u32 %v70, 4294901760
    %v189 = vsub.f32 %v70, %v188
    %190 = vmatpush.msra.mxu0 %v189
    %v191 = vand.u32 %v80, 4294901760
    %v192 = vsub.f32 %v80, %v191
    %193 = vmatmul.f32.gmra.mxu0 %v192
    %v194 = vpop.f32.mrf.mxu0
    %v195 = vadd.f32 %v161, %v194
    %v196 = vand.u32 %v83, 4294901760
    %v197 = vsub.f32 %v83, %v196
    %198 = vmatmul.f32.gmra.mxu0 %v197
    %v199 = vpop.f32.mrf.mxu0
    %v200 = vadd.f32 %v165, %v199
    %201 = vdwg.mxu0
    %202 = vmatpush.msra.mxu0 0.0
    %203 = vmatpush.msra.mxu0 0.0
    %204 = vmatpush.msra.mxu0 0.0
    %205 = vmatpush.msra.mxu0 0.0
    %206 = vmatpush.msra.mxu0 0.0
    %207 = vmatpush.msra.mxu0 0.0
    %208 = vmatpush.msra.mxu0 0.0
    %209 = vmatpush.msra.mxu0 0.0
    %210 = vmatpush.msra.mxu0 0.0
    %211 = vmatpush.msra.mxu0 0.0
    %212 = vmatpush.msra.mxu0 0.0
    %213 = vmatpush.msra.mxu0 0.0
    %v214 = vand.u32 %v73, 4294901760
    %215 = vmatpush.msra.mxu0 %v214
    %v216 = vand.u32 %v72, 4294901760
    %217 = vmatpush.msra.mxu0 %v216
    %v218 = vand.u32 %v71, 4294901760
    %219 = vmatpush.msra.mxu0 %v218
    %v220 = vand.u32 %v70, 4294901760
    %221 = vmatpush.msra.mxu0 %v220
    %v222 = vand.u32 %v80, 4294901760
    %v223 = vsub.f32 %v80, %v222
    %v224 = vand.u32 %v223, 4294901760
    %225 = vmatmul.f32.gmra.mxu0 %v224
    %v226 = vpop.f32.mrf.mxu0
    %v227 = vadd.f32 %v195, %v226
    %v228 = vand.u32 %v83, 4294901760
    %v229 = vsub.f32 %v83, %v228
    %v230 = vand.u32 %v229, 4294901760
    %231 = vmatmul.f32.gmra.mxu0 %v230
    %v232 = vpop.f32.mrf.mxu0
    %v233 = vadd.f32 %v200, %v232
    %234 = vdwg.mxu0
    %235 = vmatpush.msra.mxu0 0.0
    %236 = vmatpush.msra.mxu0 0.0
    %237 = vmatpush.msra.mxu0 0.0
    %238 = vmatpush.msra.mxu0 0.0
    %239 = vmatpush.msra.mxu0 0.0
    %240 = vmatpush.msra.mxu0 0.0
    %241 = vmatpush.msra.mxu0 0.0
    %242 = vmatpush.msra.mxu0 0.0
    %243 = vmatpush.msra.mxu0 0.0
    %244 = vmatpush.msra.mxu0 0.0
    %245 = vmatpush.msra.mxu0 0.0
    %246 = vmatpush.msra.mxu0 0.0
    %v247 = vand.u32 %v73, 4294901760
    %v248 = vsub.f32 %v73, %v247
    %v249 = vand.u32 %v248, 4294901760
    %250 = vmatpush.msra.mxu0 %v249
    %v251 = vand.u32 %v72, 4294901760
    %v252 = vsub.f32 %v72, %v251
    %v253 = vand.u32 %v252, 4294901760
    %254 = vmatpush.msra.mxu0 %v253
    %v255 = vand.u32 %v71, 4294901760
    %v256 = vsub.f32 %v71, %v255
    %v257 = vand.u32 %v256, 4294901760
    %258 = vmatpush.msra.mxu0 %v257
    %v259 = vand.u32 %v70, 4294901760
    %v260 = vsub.f32 %v70, %v259
    %v261 = vand.u32 %v260, 4294901760
    %262 = vmatpush.msra.mxu0 %v261
    %v263 = vand.u32 %v80, 4294901760
    %264 = vmatmul.f32.gmra.mxu0 %v263
    %v265 = vpop.f32.mrf.mxu0
    %v266 = vadd.f32 %v227, %v265
    %v267 = vand.u32 %v83, 4294901760
    %268 = vmatmul.f32.gmra.mxu0 %v267
    %v269 = vpop.f32.mrf.mxu0
    %v270 = vadd.f32 %v233, %v269
    %271 = vdwg.mxu0
    %272 = vmatpush.msra.mxu0 0.0
    %273 = vmatpush.msra.mxu0 0.0
    %274 = vmatpush.msra.mxu0 0.0
    %275 = vmatpush.msra.mxu0 0.0
    %276 = vmatpush.msra.mxu0 0.0
    %277 = vmatpush.msra.mxu0 0.0
    %278 = vmatpush.msra.mxu0 0.0
    %279 = vmatpush.msra.mxu0 0.0
    %280 = vmatpush.msra.mxu0 0.0
    %281 = vmatpush.msra.mxu0 0.0
    %282 = vmatpush.msra.mxu0 0.0
    %283 = vmatpush.msra.mxu0 0.0
    %v284 = vand.u32 %v73, 4294901760
    %285 = vmatpush.msra.mxu0 %v284
    %v286 = vand.u32 %v72, 4294901760
    %287 = vmatpush.msra.mxu0 %v286
    %v288 = vand.u32 %v71, 4294901760
    %289 = vmatpush.msra.mxu0 %v288
    %v290 = vand.u32 %v70, 4294901760
    %291 = vmatpush.msra.mxu0 %v290
    %v292 = vand.u32 %v80, 4294901760
    %293 = vmatmul.f32.gmra.mxu0 %v292
    %v294 = vpop.f32.mrf.mxu0
    %v295 = vadd.f32 %v266, %v294
    %v296 = vand.u32 %v83, 4294901760
    %297 = vmatmul.f32.gmra.mxu0 %v296
    %v298 = vpop.f32.mrf.mxu0
    %v299 = vadd.f32 %v270, %v298
    %300 = vdwg.mxu0
    %v301 = vmul.f32 %v295, 0.5
    %v302 = vmul.f32 %v299, 0.5
    %v303 = vmul.f32 %v295, 0.70710677
    %v304 = vmul.f32 %v299, 0.70710677
    %v305 = vmul.f32 %v303, %v303
    %v306 = vmin.f32 16.0, %v305
    %v307 = vmul.f32 %v306, 2.1237322e-06
    %v308 = vadd.f32 %v307, 0.00028619796
    %v309 = vmul.f32 %v306, %v308
    %v310 = vadd.f32 %v309, 0.0036580483
    %v311 = vmul.f32 %v306, %v310
    %v312 = vadd.f32 %v311, 0.05243302
    %v313 = vmul.f32 %v306, %v312
    %v314 = vadd.f32 %v313, 0.18741608
    %v315 = vmul.f32 %v306, %v314
    %v316 = vadd.f32 %v315, 1.1283791
    %v317 = vmul.f32 %v303, %v316
    %v318 = vmul.f32 %v306, 3.8918573e-05
    %v319 = vadd.f32 %v318, 0.001143296
    %v320 = vmul.f32 %v306, %v319
    %v321 = vadd.f32 %v320, 0.014752088
    %v322 = vmul.f32 %v306, %v321
    %v323 = vadd.f32 %v322, 0.112945676
    %v324 = vmul.f32 %v306, %v323
    %v325 = vadd.f32 %v324, 0.4994258
    %v326 = vmul.f32 %v306, %v325
    %v327 = vadd.f32 %v326, 1.0
    %v328 = vrcp.pop %v327
    %v329 = vmul.f32 %v327, %v328
    %v330 = vsub.f32 1.0, %v329
    %v331 = vmul.f32 %v328, %v330
    %v332 = vadd.f32 %v328, %v331
    %vm333 = vweird.f32 %v327
    %vm334 = vweird.f32 %v328
    %vm335 = vmor %vm333, %vm334
    %v336 = vsel %vm335, %v328, %v332
    %v337 = vand.u32 2147483647, %v327
    %vm338 = vcmp.eq.f32.partialorder %v337, 8.507059e+37
    %v339 = vand.u32 %v327, 2147483648
    %v340 = vor.u32 1.1754944e-38, %v339
    %v341 = vsel %vm338, %v340, %v336
    %v342 = vmul.f32 %v317, %v341
    %v343 = vmin.f32 %v342, 1.0
    %v344 = vmax.f32 %v343, -1.0
    %v345 = vmul.f32 %v304, %v304
    %v346 = vmin.f32 16.0, %v345
    %v347 = vmul.f32 %v346, 2.1237322e-06
    %v348 = vadd.f32 %v347, 0.00028619796
    %v349 = vmul.f32 %v346, %v348
    %v350 = vadd.f32 %v349, 0.0036580483
    %v351 = vmul.f32 %v346, %v350
    %v352 = vadd.f32 %v351, 0.05243302
    %v353 = vmul.f32 %v346, %v352
    %v354 = vadd.f32 %v353, 0.18741608
    %v355 = vmul.f32 %v346, %v354
    %v356 = vadd.f32 %v355, 1.1283791
    %v357 = vmul.f32 %v304, %v356
    %v358 = vmul.f32 %v346, 3.8918573e-05
    %v359 = vadd.f32 %v358, 0.001143296
    %v360 = vmul.f32 %v346, %v359
    %v361 = vadd.f32 %v360, 0.014752088
    %v362 = vmul.f32 %v346, %v361
    %v363 = vadd.f32 %v362, 0.112945676
    %v364 = vmul.f32 %v346, %v363
    %v365 = vadd.f32 %v364, 0.4994258
    %v366 = vmul.f32 %v346, %v365
    %v367 = vadd.f32 %v366, 1.0
    %v368 = vrcp.pop %v367
    %v369 = vmul.f32 %v367, %v368
    %v370 = vsub.f32 1.0, %v369
    %v371 = vmul.f32 %v368, %v370
    %v372 = vadd.f32 %v368, %v371
    %vm373 = vweird.f32 %v367
    %vm374 = vweird.f32 %v368
    %vm375 = vmor %vm373, %vm374
    %v376 = vsel %vm375, %v368, %v372
    %v377 = vand.u32 2147483647, %v367
    %vm378 = vcmp.eq.f32.partialorder %v377, 8.507059e+37
    %v379 = vand.u32 %v367, 2147483648
    %v380 = vor.u32 1.1754944e-38, %v379
    %v381 = vsel %vm378, %v380, %v376
    %v382 = vmul.f32 %v357, %v381
    %v383 = vmin.f32 %v382, 1.0
    %v384 = vmax.f32 %v383, -1.0
    %v385 = vadd.f32 %v344, 1.0
    %v386 = vadd.f32 %v384, 1.0
    %v387 = vmul.f32 %v301, %v385
    %v388 = vmul.f32 %v302, %v386
    %v389 = vld [vmem:[#allocation7] sm:$0xff]
    %v390 = vld [vmem:[#allocation7 + $0x8] sm:$0xff]
    %v391 = vld [vmem:[#allocation7 + $0x10] sm:$0xff]
    %v392 = vld [vmem:[#allocation7 + $0x18] sm:$0xff]
    %v393 = vld [vmem:[#allocation7 + $0x20] sm:$0xff]
    %v394 = vld [vmem:[#allocation7 + $0x28] sm:$0xff]
    %v395 = vld [vmem:[#allocation7 + $0x30] sm:$0xff]
    %v396 = vld [vmem:[#allocation7 + $0x38] sm:$0xff]
    %v397 = vld [vmem:[%s4] sm:$0x1]
    %v399 = vperm.slane %v397, 0
    %vm401 = vcmask 523264
    %v403 = vsel %vm401, %v387, 0
    %v406 = vsel %vm401, %v388, 0
    %408 = vmatpush.msra.mxu0 0.0
    %409 = vmatpush.msra.mxu0 0.0
    %410 = vmatpush.msra.mxu0 0.0
    %411 = vmatpush.msra.mxu0 0.0
    %412 = vmatpush.msra.mxu0 0.0
    %413 = vmatpush.msra.mxu0 0.0
    %414 = vmatpush.msra.mxu0 0.0
    %415 = vmatpush.msra.mxu0 0.0
    %v416 = vand.u32 %v396, 4294901760
    %417 = vmatpush.msra.mxu0 %v416
    %v418 = vand.u32 %v395, 4294901760
    %419 = vmatpush.msra.mxu0 %v418
    %v420 = vand.u32 %v394, 4294901760
    %421 = vmatpush.msra.mxu0 %v420
    %v422 = vand.u32 %v393, 4294901760
    %423 = vmatpush.msra.mxu0 %v422
    %v424 = vand.u32 %v392, 4294901760
    %425 = vmatpush.msra.mxu0 %v424
    %v426 = vand.u32 %v391, 4294901760
    %427 = vmatpush.msra.mxu0 %v426
    %v428 = vand.u32 %v390, 4294901760
    %429 = vmatpush.msra.mxu0 %v428
    %v430 = vand.u32 %v389, 4294901760
    %431 = vmatpush.msra.mxu0 %v430
    %v432 = vand.u32 %v403, 4294901760
    %v433 = vsub.f32 %v403, %v432
    %v434 = vand.u32 %v433, 4294901760
    %v435 = vsub.f32 %v433, %v434
    %v436 = vand.u32 %v435, 4294901760
    %437 = vmatmul.f32.gmra.mxu0 %v436
    %v438 = vpop.f32.mrf.mxu0
    %v439 = vadd.f32 %v399, %v438
    %v440 = vand.u32 %v406, 4294901760
    %v441 = vsub.f32 %v406, %v440
    %v442 = vand.u32 %v441, 4294901760
    %v443 = vsub.f32 %v441, %v442
    %v444 = vand.u32 %v443, 4294901760
    %445 = vmatmul.f32.gmra.mxu0 %v444
    %v446 = vpop.f32.mrf.mxu0
    %v447 = vadd.f32 %v399, %v446
    %448 = vdwg.mxu0
    %449 = vmatpush.msra.mxu0 0.0
    %450 = vmatpush.msra.mxu0 0.0
    %451 = vmatpush.msra.mxu0 0.0
    %452 = vmatpush.msra.mxu0 0.0
    %453 = vmatpush.msra.mxu0 0.0
    %454 = vmatpush.msra.mxu0 0.0
    %455 = vmatpush.msra.mxu0 0.0
    %456 = vmatpush.msra.mxu0 0.0
    %v457 = vand.u32 %v396, 4294901760
    %v458 = vsub.f32 %v396, %v457
    %v459 = vand.u32 %v458, 4294901760
    %v460 = vsub.f32 %v458, %v459
    %v461 = vand.u32 %v460, 4294901760
    %462 = vmatpush.msra.mxu0 %v461
    %v463 = vand.u32 %v395, 4294901760
    %v464 = vsub.f32 %v395, %v463
    %v465 = vand.u32 %v464, 4294901760
    %v466 = vsub.f32 %v464, %v465
    %v467 = vand.u32 %v466, 4294901760
    %468 = vmatpush.msra.mxu0 %v467
    %v469 = vand.u32 %v394, 4294901760
    %v470 = vsub.f32 %v394, %v469
    %v471 = vand.u32 %v470, 4294901760
    %v472 = vsub.f32 %v470, %v471
    %v473 = vand.u32 %v472, 4294901760
    %474 = vmatpush.msra.mxu0 %v473
    %v475 = vand.u32 %v393, 4294901760
    %v476 = vsub.f32 %v393, %v475
    %v477 = vand.u32 %v476, 4294901760
    %v478 = vsub.f32 %v476, %v477
    %v479 = vand.u32 %v478, 4294901760
    %480 = vmatpush.msra.mxu0 %v479
    %v481 = vand.u32 %v392, 4294901760
    %v482 = vsub.f32 %v392, %v481
    %v483 = vand.u32 %v482, 4294901760
    %v484 = vsub.f32 %v482, %v483
    %v485 = vand.u32 %v484, 4294901760
    %486 = vmatpush.msra.mxu0 %v485
    %v487 = vand.u32 %v391, 4294901760
    %v488 = vsub.f32 %v391, %v487
    %v489 = vand.u32 %v488, 4294901760
    %v490 = vsub.f32 %v488, %v489
    %v491 = vand.u32 %v490, 4294901760
    %492 = vmatpush.msra.mxu0 %v491
    %v493 = vand.u32 %v390, 4294901760
    %v494 = vsub.f32 %v390, %v493
    %v495 = vand.u32 %v494, 4294901760
    %v496 = vsub.f32 %v494, %v495
    %v497 = vand.u32 %v496, 4294901760
    %498 = vmatpush.msra.mxu0 %v497
    %v499 = vand.u32 %v389, 4294901760
    %v500 = vsub.f32 %v389, %v499
    %v501 = vand.u32 %v500, 4294901760
    %v502 = vsub.f32 %v500, %v501
    %v503 = vand.u32 %v502, 4294901760
    %504 = vmatpush.msra.mxu0 %v503
    %v505 = vand.u32 %v403, 4294901760
    %506 = vmatmul.f32.gmra.mxu0 %v505
    %v507 = vpop.f32.mrf.mxu0
    %v508 = vadd.f32 %v439, %v507
    %v509 = vand.u32 %v406, 4294901760
    %510 = vmatmul.f32.gmra.mxu0 %v509
    %v511 = vpop.f32.mrf.mxu0
    %v512 = vadd.f32 %v447, %v511
    %513 = vdwg.mxu0
    %514 = vmatpush.msra.mxu0 0.0
    %515 = vmatpush.msra.mxu0 0.0
    %516 = vmatpush.msra.mxu0 0.0
    %517 = vmatpush.msra.mxu0 0.0
    %518 = vmatpush.msra.mxu0 0.0
    %519 = vmatpush.msra.mxu0 0.0
    %520 = vmatpush.msra.mxu0 0.0
    %521 = vmatpush.msra.mxu0 0.0
    %v522 = vand.u32 %v396, 4294901760
    %v523 = vsub.f32 %v396, %v522
    %524 = vmatpush.msra.mxu0 %v523
    %v525 = vand.u32 %v395, 4294901760
    %v526 = vsub.f32 %v395, %v525
    %527 = vmatpush.msra.mxu0 %v526
    %v528 = vand.u32 %v394, 4294901760
    %v529 = vsub.f32 %v394, %v528
    %530 = vmatpush.msra.mxu0 %v529
    %v531 = vand.u32 %v393, 4294901760
    %v532 = vsub.f32 %v393, %v531
    %533 = vmatpush.msra.mxu0 %v532
    %v534 = vand.u32 %v392, 4294901760
    %v535 = vsub.f32 %v392, %v534
    %536 = vmatpush.msra.mxu0 %v535
    %v537 = vand.u32 %v391, 4294901760
    %v538 = vsub.f32 %v391, %v537
    %539 = vmatpush.msra.mxu0 %v538
    %v540 = vand.u32 %v390, 4294901760
    %v541 = vsub.f32 %v390, %v540
    %542 = vmatpush.msra.mxu0 %v541
    %v543 = vand.u32 %v389, 4294901760
    %v544 = vsub.f32 %v389, %v543
    %545 = vmatpush.msra.mxu0 %v544
    %v546 = vand.u32 %v403, 4294901760
    %v547 = vsub.f32 %v403, %v546
    %548 = vmatmul.f32.gmra.mxu0 %v547
    %v549 = vpop.f32.mrf.mxu0
    %v550 = vadd.f32 %v508, %v549
    %v551 = vand.u32 %v406, 4294901760
    %v552 = vsub.f32 %v406, %v551
    %553 = vmatmul.f32.gmra.mxu0 %v552
    %v554 = vpop.f32.mrf.mxu0
    %v555 = vadd.f32 %v512, %v554
    %556 = vdwg.mxu0
    %557 = vmatpush.msra.mxu0 0.0
    %558 = vmatpush.msra.mxu0 0.0
    %559 = vmatpush.msra.mxu0 0.0
    %560 = vmatpush.msra.mxu0 0.0
    %561 = vmatpush.msra.mxu0 0.0
    %562 = vmatpush.msra.mxu0 0.0
    %563 = vmatpush.msra.mxu0 0.0
    %564 = vmatpush.msra.mxu0 0.0
    %v565 = vand.u32 %v396, 4294901760
    %566 = vmatpush.msra.mxu0 %v565
    %v567 = vand.u32 %v395, 4294901760
    %568 = vmatpush.msra.mxu0 %v567
    %v569 = vand.u32 %v394, 4294901760
    %570 = vmatpush.msra.mxu0 %v569
    %v571 = vand.u32 %v393, 4294901760
    %572 = vmatpush.msra.mxu0 %v571
    %v573 = vand.u32 %v392, 4294901760
    %574 = vmatpush.msra.mxu0 %v573
    %v575 = vand.u32 %v391, 4294901760
    %576 = vmatpush.msra.mxu0 %v575
    %v577 = vand.u32 %v390, 4294901760
    %578 = vmatpush.msra.mxu0 %v577
    %v579 = vand.u32 %v389, 4294901760
    %580 = vmatpush.msra.mxu0 %v579
    %v581 = vand.u32 %v403, 4294901760
    %v582 = vsub.f32 %v403, %v581
    %v583 = vand.u32 %v582, 4294901760
    %584 = vmatmul.f32.gmra.mxu0 %v583
    %v585 = vpop.f32.mrf.mxu0
    %v586 = vadd.f32 %v550, %v585
    %v587 = vand.u32 %v406, 4294901760
    %v588 = vsub.f32 %v406, %v587
    %v589 = vand.u32 %v588, 4294901760
    %590 = vmatmul.f32.gmra.mxu0 %v589
    %v591 = vpop.f32.mrf.mxu0
    %v592 = vadd.f32 %v555, %v591
    %593 = vdwg.mxu0
    %594 = vmatpush.msra.mxu0 0.0
    %595 = vmatpush.msra.mxu0 0.0
    %596 = vmatpush.msra.mxu0 0.0
    %597 = vmatpush.msra.mxu0 0.0
    %598 = vmatpush.msra.mxu0 0.0
    %599 = vmatpush.msra.mxu0 0.0
    %600 = vmatpush.msra.mxu0 0.0
    %601 = vmatpush.msra.mxu0 0.0
    %v602 = vand.u32 %v396, 4294901760
    %v603 = vsub.f32 %v396, %v602
    %v604 = vand.u32 %v603, 4294901760
    %605 = vmatpush.msra.mxu0 %v604
    %v606 = vand.u32 %v395, 4294901760
    %v607 = vsub.f32 %v395, %v606
    %v608 = vand.u32 %v607, 4294901760
    %609 = vmatpush.msra.mxu0 %v608
    %v610 = vand.u32 %v394, 4294901760
    %v611 = vsub.f32 %v394, %v610
    %v612 = vand.u32 %v611, 4294901760
    %613 = vmatpush.msra.mxu0 %v612
    %v614 = vand.u32 %v393, 4294901760
    %v615 = vsub.f32 %v393, %v614
    %v616 = vand.u32 %v615, 4294901760
    %617 = vmatpush.msra.mxu0 %v616
    %v618 = vand.u32 %v392, 4294901760
    %v619 = vsub.f32 %v392, %v618
    %v620 = vand.u32 %v619, 4294901760
    %621 = vmatpush.msra.mxu0 %v620
    %v622 = vand.u32 %v391, 4294901760
    %v623 = vsub.f32 %v391, %v622
    %v624 = vand.u32 %v623, 4294901760
    %625 = vmatpush.msra.mxu0 %v624
    %v626 = vand.u32 %v390, 4294901760
    %v627 = vsub.f32 %v390, %v626
    %v628 = vand.u32 %v627, 4294901760
    %629 = vmatpush.msra.mxu0 %v628
    %v630 = vand.u32 %v389, 4294901760
    %v631 = vsub.f32 %v389, %v630
    %v632 = vand.u32 %v631, 4294901760
    %633 = vmatpush.msra.mxu0 %v632
    %v634 = vand.u32 %v403, 4294901760
    %635 = vmatmul.f32.gmra.mxu0 %v634
    %v636 = vpop.f32.mrf.mxu0
    %v637 = vadd.f32 %v586, %v636
    %v638 = vand.u32 %v406, 4294901760
    %639 = vmatmul.f32.gmra.mxu0 %v638
    %v640 = vpop.f32.mrf.mxu0
    %v641 = vadd.f32 %v592, %v640
    %642 = vdwg.mxu0
    %643 = vmatpush.msra.mxu0 0.0
    %644 = vmatpush.msra.mxu0 0.0
    %645 = vmatpush.msra.mxu0 0.0
    %646 = vmatpush.msra.mxu0 0.0
    %647 = vmatpush.msra.mxu0 0.0
    %648 = vmatpush.msra.mxu0 0.0
    %649 = vmatpush.msra.mxu0 0.0
    %650 = vmatpush.msra.mxu0 0.0
    %v651 = vand.u32 %v396, 4294901760
    %652 = vmatpush.msra.mxu0 %v651
    %v653 = vand.u32 %v395, 4294901760
    %654 = vmatpush.msra.mxu0 %v653
    %v655 = vand.u32 %v394, 4294901760
    %656 = vmatpush.msra.mxu0 %v655
    %v657 = vand.u32 %v393, 4294901760
    %658 = vmatpush.msra.mxu0 %v657
    %v659 = vand.u32 %v392, 4294901760
    %660 = vmatpush.msra.mxu0 %v659
    %v661 = vand.u32 %v391, 4294901760
    %662 = vmatpush.msra.mxu0 %v661
    %v663 = vand.u32 %v390, 4294901760
    %664 = vmatpush.msra.mxu0 %v663
    %v665 = vand.u32 %v389, 4294901760
    %666 = vmatpush.msra.mxu0 %v665
    %v667 = vand.u32 %v403, 4294901760
    %668 = vmatmul.f32.gmra.mxu0 %v667
    %v669 = vpop.f32.mrf.mxu0
    %v670 = vadd.f32 %v637, %v669
    %v671 = vand.u32 %v406, 4294901760
    %672 = vmatmul.f32.gmra.mxu0 %v671
    %v673 = vpop.f32.mrf.mxu0
    %v674 = vadd.f32 %v641, %v673
    %675 = vdwg.mxu0
    %676 = vst [vmem:[#allocation8] sm:$0xff] %v670
    %677 = vst [vmem:[#allocation8 + $0x8] sm:$0xff] %v674
    // Predicated region
    $region34: #{tpu_custom_call.1} parent=1 // pred_check
      _
    $region35: #{tpu_custom_call.1} parent=1 // pred_check_branch
      %679 = sbr.rel (0) target = $region37
    $region36: #{tpu_custom_call.1} parent=1 // pred_region
      %681 = vsyncadd [#allocation4], 0
      %s682 = sshll.u32 [#allocation8], 4
      %s683 = int_to_ptr.vmem [resolvable:$true] %s682
      %s684 = sshll.u32 %s5, 4
      %s685 = int_to_ptr.hbm [resolvable:$true] %s684
      %690 = dma.vmem_to_hbm [thread:$0]  %s683, 256, %s685, [#allocation4], 128, 128, 8
    $region37: #{tpu_custom_call.1} parent=1 // pred_fallthru
      _
    // Predicated region
    $region38: #{tpu_custom_call.1} parent=1 // pred_check
      _
    $region39: #{tpu_custom_call.1} parent=1 // pred_check_branch
      %692 = sbr.rel (0) target = $region41
    $region40: #{tpu_custom_call.1} parent=1 // pred_region
      %694 = dma.done [#allocation4], 256
    $region41: #{tpu_custom_call.1} parent=1 // pred_fallthru
      _
    %695 = vsyncpa [#allocation3], 1
    %696 = vsyncpa [#allocation6], 1
    %697 = vsyncpa [#allocation4], 1

</llo_original>
